<compile_context>
chip_gen: v7x
topology: tpu7x:2x2x1
jax: 0.10.0
libtpu: 0.0.40
codegen_flags: <defaults>
</compile_context>

<pallas_src>
import functools

import jax
import jax.numpy as jnp
from jax import lax
from jax.experimental import pallas as pl
from jax.experimental.pallas import tpu as pltpu

VMEM_SPEC = pl.BlockSpec(memory_space=pltpu.MemorySpace.VMEM)


# ----------------------------------------------------------------------------
# in-kernel helpers (operate on traced values)
# ----------------------------------------------------------------------------
def _batchnorm(y, gamma, beta, eps):
    # nn.BatchNorm1d training mode (batch statistics, biased variance).
    # One reduction pass over [y | y*y]; var = E[x^2] - mean^2 (fine in f32 at
    # these magnitudes — slightly less robust than the two-pass form).
    n_rows, n_cols = y.shape
    stats = jnp.sum(jnp.concatenate([y, y * y], axis=1), axis=0,
                    keepdims=True) * (1.0 / n_rows)
    mean = stats[:, :n_cols]
    var = stats[:, n_cols:] - mean * mean
    return (y - mean) * lax.rsqrt(var + eps) * gamma + beta


def _post_branch(x, res, wo, wf1, bf1, wf2, tab, eps):
    # O-projection + residual + BN1 + FFN(ReLU) + residual + BN2.
    # Dropout p = 0.0 -> no-op.  FFN hidden stays VMEM/vreg resident.
    # tab rows: 0=b_O, 1=b_ffn2, 2=gamma1, 3=beta1, 4=gamma2, 5=beta2
    y = jnp.dot(x, wo, preferred_element_type=jnp.float32) + tab[0:1, :] + res
    y = _batchnorm(y, tab[2:3, :], tab[3:4, :], eps)
    hid = jnp.maximum(jnp.dot(y, wf1, preferred_element_type=jnp.float32) + bf1, 0.0)
    y2 = jnp.dot(hid, wf2, preferred_element_type=jnp.float32) + tab[1:2, :] + y
    return _batchnorm(y2, tab[4:5, :], tab[5:6, :], eps)


# ----------------------------------------------------------------------------
# Single fused kernel: full GraphTransformerLayer forward
# ----------------------------------------------------------------------------
def _layer_kernel(h_ref, e_ref, srcc_ref, dstc_ref, dstr_ref,
                  wqkv_ref, wpe2_ref, bpe2_ref, hones_ref,
                  woh_ref, wfh1_ref, bfh1_ref, wfh2_ref, tabh_ref,
                  woe_ref, wfe1_ref, bfe1_ref, wfe2_ref, tabe_ref,
                  hout_ref, eout_ref, *, hd, inv_sqrt_d, eps):
    h_in = h_ref[...]
    n_nodes = h_in.shape[0]
    n_edges = e_ref.shape[0]
    qkv_lanes = wqkv_ref.shape[1]

    # fused node projection Q|K|V (use_bias=False): one lane-dense 128-wide matmul
    qkv = jnp.dot(h_in, wqkv_ref[...], preferred_element_type=jnp.float32)      # (N, 128)

    # fused edge projections proj_e | e_input_proj (only the latter has a bias)
    pe2 = jnp.dot(e_ref[...], wpe2_ref[...],
                  preferred_element_type=jnp.float32) + bpe2_ref[...]           # (E, 2*hd)
    proj_e = pe2[:, :hd]            # e_attn_out ('e_out' in the DGL code = raw proj_e)
    e_res = pe2[:, hd:2 * hd]       # e_input_proj(e_in1) residual

    # one-hot gather / scatter masks built IN-kernel from int32 indices (no
    # (E,N) f32 matrices ever touch HBM); pure VPU iota + compare.
    lane_node = lax.broadcasted_iota(jnp.int32, (n_edges, n_nodes), 1)
    g_dst = (lane_node == dstc_ref[...]).astype(jnp.float32)                    # (E, N)
    g_src = (lane_node == srcc_ref[...]).astype(jnp.float32)                    # (E, N)
    row_node = lax.broadcasted_iota(jnp.int32, (n_nodes, n_edges), 0)
    m_dst = (row_node == dstr_ref[...]).astype(jnp.float32)                     # (N, E)

    # fused gather: ONE (E, 2N) x (2N, 128) MXU pass -> [q_dst | k_src | v_src | pad]
    gcat = jnp.concatenate([g_dst, g_src], axis=1)                              # (E, 2N)
    top = jnp.concatenate(
        [qkv[:, :hd], jnp.zeros((n_nodes, qkv_lanes - hd), jnp.float32)], axis=1)
    bot = jnp.concatenate(
        [jnp.zeros((n_nodes, hd), jnp.float32), qkv[:, hd:]], axis=1)
    stacked = jnp.concatenate([top, bot], axis=0)                               # (2N, 128)
    gath = jnp.dot(gcat, stacked, preferred_element_type=jnp.float32)           # (E, 128)
    q_dst = gath[:, :hd]
    k_src = gath[:, hd:2 * hd]
    v_src = gath[:, 2 * hd:3 * hd]

    # per-edge score; the block-diagonal ones matmul does the per-head sum AND
    # the per-head broadcast across D lanes in one MXU pass (no XLU slices).
    s = (k_src * q_dst) * inv_sqrt_d * proj_e                                   # (E, hd)
    ssum_b = jnp.dot(s, hones_ref[...], preferred_element_type=jnp.float32)     # (E, hd)
    score_b = jnp.exp(jnp.clip(ssum_b, -5.0, 5.0))                              # (E, hd)

    # ONE (N,E)x(E,2*hd) incidence matmul aggregates wV and z together; the z
    # half is already head-broadcast because score_b repeats per head lane.
    packed = jnp.concatenate([v_src * score_b, score_b], axis=1)                # (E, 2*hd)
    agg = jnp.dot(m_dst, packed, preferred_element_type=jnp.float32)            # (N, 2*hd)
    h_attn = agg[:, :hd] / (agg[:, hd:2 * hd] + 1e-6)

    # node branch: O_h + residual(h_in1) + BN1 + FFN + residual + BN2
    hout_ref[...] = _post_branch(h_attn, h_in, woh_ref[...], wfh1_ref[...],
                                 bfh1_ref[...], wfh2_ref[...], tabh_ref[...], eps)
    # edge branch: O_e + residual(e_input_proj(e_in1)) + BN1 + FFN + residual + BN2
    eout_ref[...] = _post_branch(proj_e, e_res, woe_ref[...], wfe1_ref[...],
                                 bfe1_ref[...], wfe2_ref[...], tabe_ref[...], eps)


# ----------------------------------------------------------------------------
# Parameter init (deterministic; shapes follow the PyTorch __init__).
# use_bias=False for Q/K/V/proj_e (module default); BN affine = ones/zeros.
# ----------------------------------------------------------------------------
def init_params(key, in_dim, out_dim, num_heads, in_edge_dim):
    ks = jax.random.split(key, 18)
    w = lambda k, shp: 0.1 * jax.random.normal(k, shp, jnp.float32)
    return {
        "Wq": w(ks[0], (in_dim, out_dim)),
        "Wk": w(ks[1], (in_dim, out_dim)),
        "Wv": w(ks[2], (in_dim, out_dim)),
        "Wpe": w(ks[3], (in_edge_dim, out_dim)),
        "W_einp": w(ks[4], (in_edge_dim, out_dim)), "b_einp": w(ks[5], (out_dim,)),
        "W_Oh": w(ks[6], (out_dim, out_dim)), "b_Oh": w(ks[7], (out_dim,)),
        "W_Oe": w(ks[8], (out_dim, out_dim)), "b_Oe": w(ks[9], (out_dim,)),
        "W_ffn_h1": w(ks[10], (out_dim, 2 * out_dim)), "b_ffn_h1": w(ks[11], (2 * out_dim,)),
        "W_ffn_h2": w(ks[12], (2 * out_dim, out_dim)), "b_ffn_h2": w(ks[13], (out_dim,)),
        "W_ffn_e1": w(ks[14], (out_dim, 2 * out_dim)), "b_ffn_e1": w(ks[15], (2 * out_dim,)),
        "W_ffn_e2": w(ks[16], (2 * out_dim, out_dim)), "b_ffn_e2": w(ks[17], (out_dim,)),
        "bn1_h_g": jnp.ones((out_dim,), jnp.float32), "bn1_h_b": jnp.zeros((out_dim,), jnp.float32),
        "bn1_e_g": jnp.ones((out_dim,), jnp.float32), "bn1_e_b": jnp.zeros((out_dim,), jnp.float32),
        "bn2_h_g": jnp.ones((out_dim,), jnp.float32), "bn2_h_b": jnp.zeros((out_dim,), jnp.float32),
        "bn2_e_g": jnp.ones((out_dim,), jnp.float32), "bn2_e_b": jnp.zeros((out_dim,), jnp.float32),
    }


def pack_params(p, num_heads):
    """One-time weight packing: fused Q|K|V padded to 128 lanes, fused
    proj_e|e_input_proj, block-diagonal head-ones matrix, per-branch
    [b_O, b_ffn2, gamma1, beta1, gamma2, beta2] tables."""
    out_dim = p["W_Oh"].shape[0]
    d_head = out_dim // num_heads

    def pad_lanes(wm, mult=128):
        pad = (-wm.shape[1]) % mult
        if pad:
            wm = jnp.concatenate([wm, jnp.zeros((wm.shape[0], pad), wm.dtype)], axis=1)
        return wm

    head_id = jnp.arange(out_dim, dtype=jnp.int32) // d_head
    head_ones = (head_id[:, None] == head_id[None, :]).astype(jnp.float32)      # (hd, hd)

    return {
        "wqkv": pad_lanes(jnp.concatenate([p["Wq"], p["Wk"], p["Wv"]], axis=1)),  # (in, 128)
        "wpe2": jnp.concatenate([p["Wpe"], p["W_einp"]], axis=1),                 # (edge, 2*out)
        "bpe2": jnp.concatenate(
            [jnp.zeros((out_dim,), jnp.float32), p["b_einp"]]).reshape(1, -1),
        "head_ones": head_ones,
        "W_Oh": p["W_Oh"],
        "W_ffn_h1": p["W_ffn_h1"], "b_ffn_h1": p["b_ffn_h1"].reshape(1, -1),
        "W_ffn_h2": p["W_ffn_h2"],
        "tab_h": jnp.stack([p["b_Oh"], p["b_ffn_h2"],
                            p["bn1_h_g"], p["bn1_h_b"], p["bn2_h_g"], p["bn2_h_b"]]),
        "W_Oe": p["W_Oe"],
        "W_ffn_e1": p["W_ffn_e1"], "b_ffn_e1": p["b_ffn_e1"].reshape(1, -1),
        "W_ffn_e2": p["W_ffn_e2"],
        "tab_e": jnp.stack([p["b_Oe"], p["b_ffn_e2"],
                            p["bn1_e_g"], p["bn1_e_b"], p["bn2_e_g"], p["bn2_e_b"]]),
    }


# ----------------------------------------------------------------------------
# Full forward pass of GraphTransformerLayer (single pallas_call).
#   h: [N, in_dim], e: [E, in_edge_dim], src/dst: [E] int32 (message src -> dst)
# ----------------------------------------------------------------------------
def graph_transformer_layer(packed, h, e, src, dst, num_heads):
    h = h.astype(jnp.float32)
    e = e.astype(jnp.float32)            # e = e.float()
    n_nodes, n_edges = h.shape[0], e.shape[0]
    out_dim = packed["W_Oh"].shape[0]
    d_head = out_dim // num_heads
    assert d_head * num_heads == out_dim

    # Only the raw int32 indices cross the pallas_call boundary (a few hundred
    # bytes); the one-hot / incidence masks are generated inside the kernel.
    src_col = src.astype(jnp.int32).reshape(n_edges, 1)
    dst_col = dst.astype(jnp.int32).reshape(n_edges, 1)
    dst_row = dst.astype(jnp.int32).reshape(1, n_edges)

    kern = functools.partial(_layer_kernel, hd=out_dim,
                             inv_sqrt_d=1.0 / (d_head ** 0.5), eps=1e-5)
    return pl.pallas_call(
        kern,
        out_shape=(jax.ShapeDtypeStruct((n_nodes, out_dim), jnp.float32),
                   jax.ShapeDtypeStruct((n_edges, out_dim), jnp.float32)),
        in_specs=[VMEM_SPEC] * 19,
        out_specs=(VMEM_SPEC, VMEM_SPEC),
    )(h, e, src_col, dst_col, dst_row,
      packed["wqkv"], packed["wpe2"], packed["bpe2"], packed["head_ones"],
      packed["W_Oh"], packed["W_ffn_h1"], packed["b_ffn_h1"], packed["W_ffn_h2"],
      packed["tab_h"],
      packed["W_Oe"], packed["W_ffn_e1"], packed["b_ffn_e1"], packed["W_ffn_e2"],
      packed["tab_e"])


if __name__ == "__main__":
    # Small graph: 16 nodes, 48 edges; in_dim == out_dim (required by the residual).
    N, E = 16, 48
    IN_DIM = OUT_DIM = 32
    NUM_HEADS = 4
    IN_EDGE_DIM = 16

    key = jax.random.PRNGKey(0)
    k_h, k_e, k_src, k_dst, k_param = jax.random.split(key, 5)

    h = jax.random.normal(k_h, (N, IN_DIM), jnp.float32)
    e = jax.random.normal(k_e, (E, IN_EDGE_DIM), jnp.float32)
    src = jax.random.randint(k_src, (E,), 0, N, dtype=jnp.int32)
    dst = jax.random.randint(k_dst, (E,), 0, N, dtype=jnp.int32)

    params = init_params(k_param, IN_DIM, OUT_DIM, NUM_HEADS, IN_EDGE_DIM)
    packed = pack_params(params, NUM_HEADS)

    layer = jax.jit(functools.partial(graph_transformer_layer, num_heads=NUM_HEADS))
    h_out, e_out = layer(packed, h, e, src, dst)
    jax.block_until_ready((h_out, e_out))

    assert h_out.shape == (N, OUT_DIM) and e_out.shape == (E, OUT_DIM)
    assert bool(jnp.all(jnp.isfinite(h_out))) and bool(jnp.all(jnp.isfinite(e_out)))
    print("KERNEL_OK")
</pallas_src>

<mosaic_0001>
module attributes {stable_mosaic.version = 11 : i64} {
  func.func @_layer_kernel(%arg0: memref<16x32xf32, #tpu.memory_space<vmem>>, %arg1: memref<48x16xf32, #tpu.memory_space<vmem>>, %arg2: memref<48x1xi32, #tpu.memory_space<vmem>>, %arg3: memref<48x1xi32, #tpu.memory_space<vmem>>, %arg4: memref<1x48xi32, #tpu.memory_space<vmem>>, %arg5: memref<32x128xf32, #tpu.memory_space<vmem>>, %arg6: memref<16x64xf32, #tpu.memory_space<vmem>>, %arg7: memref<1x64xf32, #tpu.memory_space<vmem>>, %arg8: memref<32x32xf32, #tpu.memory_space<vmem>>, %arg9: memref<32x32xf32, #tpu.memory_space<vmem>>, %arg10: memref<32x64xf32, #tpu.memory_space<vmem>>, %arg11: memref<1x64xf32, #tpu.memory_space<vmem>>, %arg12: memref<64x32xf32, #tpu.memory_space<vmem>>, %arg13: memref<6x32xf32, #tpu.memory_space<vmem>>, %arg14: memref<32x32xf32, #tpu.memory_space<vmem>>, %arg15: memref<32x64xf32, #tpu.memory_space<vmem>>, %arg16: memref<1x64xf32, #tpu.memory_space<vmem>>, %arg17: memref<64x32xf32, #tpu.memory_space<vmem>>, %arg18: memref<6x32xf32, #tpu.memory_space<vmem>>, %arg19: memref<16x32xf32, #tpu.memory_space<vmem>>, %arg20: memref<48x32xf32, #tpu.memory_space<vmem>>) attributes {dimension_semantics = [], scalar_prefetch = 0 : i64, scratch_operands = 0 : i64, tpu.core_type = #tpu.core_type<tc>} {
    %c0 = arith.constant 0 : index
    %c0_0 = arith.constant 0 : index
    %0 = vector.load %arg0[%c0, %c0_0] : memref<16x32xf32, #tpu.memory_space<vmem>>, vector<16x32xf32>
    %c0_1 = arith.constant 0 : index
    %c0_2 = arith.constant 0 : index
    %1 = vector.load %arg5[%c0_1, %c0_2] : memref<32x128xf32, #tpu.memory_space<vmem>>, vector<32x128xf32>
    %cst = arith.constant dense<0.000000e+00> : vector<16x128xf32>
    %2 = tpu.matmul %0, %1, %cst {dimension_numbers = #tpu.dot_dimension_numbers<[1], [0], [0], [1], [0, 0, 1, 1], [], []>} : vector<16x32xf32>, vector<32x128xf32>, vector<16x128xf32> -> vector<16x128xf32>
    %c0_3 = arith.constant 0 : index
    %c0_4 = arith.constant 0 : index
    %3 = vector.load %arg1[%c0_3, %c0_4] : memref<48x16xf32, #tpu.memory_space<vmem>>, vector<48x16xf32>
    %c0_5 = arith.constant 0 : index
    %c0_6 = arith.constant 0 : index
    %4 = vector.load %arg6[%c0_5, %c0_6] : memref<16x64xf32, #tpu.memory_space<vmem>>, vector<16x64xf32>
    %cst_7 = arith.constant dense<0.000000e+00> : vector<48x64xf32>
    %5 = tpu.matmul %3, %4, %cst_7 {dimension_numbers = #tpu.dot_dimension_numbers<[1], [0], [0], [1], [0, 0, 1, 1], [], []>} : vector<48x16xf32>, vector<16x64xf32>, vector<48x64xf32> -> vector<48x64xf32>
    %c0_8 = arith.constant 0 : index
    %c0_9 = arith.constant 0 : index
    %6 = vector.load %arg7[%c0_8, %c0_9] : memref<1x64xf32, #tpu.memory_space<vmem>>, vector<1x64xf32>
    %7 = vector.broadcast %6 : vector<1x64xf32> to vector<48x64xf32>
    %8 = arith.addf %5, %7 : vector<48x64xf32>
    %9 = vector.extract_strided_slice %8 {offsets = [0, 0], sizes = [48, 32], strides = [1, 1]} : vector<48x64xf32> to vector<48x32xf32>
    %10 = vector.extract_strided_slice %8 {offsets = [0, 32], sizes = [48, 32], strides = [1, 1]} : vector<48x64xf32> to vector<48x32xf32>
    %11 = tpu.iota {dimensions = array<i32: 1>} : vector<48x16xi32>
    %c0_10 = arith.constant 0 : index
    %c0_11 = arith.constant 0 : index
    %12 = vector.load %arg3[%c0_10, %c0_11] : memref<48x1xi32, #tpu.memory_space<vmem>>, vector<48x1xi32>
    %13 = vector.broadcast %12 : vector<48x1xi32> to vector<48x16xi32>
    %14 = arith.cmpi eq, %11, %13 : vector<48x16xi32>
    %15 = arith.extui %14 : vector<48x16xi1> to vector<48x16xi32>
    %16 = arith.sitofp %15 : vector<48x16xi32> to vector<48x16xf32>
    %c0_12 = arith.constant 0 : index
    %c0_13 = arith.constant 0 : index
    %17 = vector.load %arg2[%c0_12, %c0_13] : memref<48x1xi32, #tpu.memory_space<vmem>>, vector<48x1xi32>
    %18 = vector.broadcast %17 : vector<48x1xi32> to vector<48x16xi32>
    %19 = arith.cmpi eq, %11, %18 : vector<48x16xi32>
    %20 = arith.extui %19 : vector<48x16xi1> to vector<48x16xi32>
    %21 = arith.sitofp %20 : vector<48x16xi32> to vector<48x16xf32>
    %22 = tpu.iota {dimensions = array<i32: 0>} : vector<16x48xi32>
    %c0_14 = arith.constant 0 : index
    %c0_15 = arith.constant 0 : index
    %23 = vector.load %arg4[%c0_14, %c0_15] : memref<1x48xi32, #tpu.memory_space<vmem>>, vector<1x48xi32>
    %24 = vector.broadcast %23 : vector<1x48xi32> to vector<16x48xi32>
    %25 = arith.cmpi eq, %22, %24 : vector<16x48xi32>
    %26 = arith.extui %25 : vector<16x48xi1> to vector<16x48xi32>
    %27 = arith.sitofp %26 : vector<16x48xi32> to vector<16x48xf32>
    %28 = tpu.concatenate %16, %21 in 1 : vector<48x16xf32>, vector<48x16xf32> -> vector<48x32xf32>
    %29 = vector.extract_strided_slice %2 {offsets = [0, 0], sizes = [16, 32], strides = [1, 1]} : vector<16x128xf32> to vector<16x32xf32>
    %cst_16 = arith.constant 0.000000e+00 : f32
    %30 = vector.broadcast %cst_16 : f32 to vector<16x96xf32>
    %31 = tpu.concatenate %29, %30 in 1 : vector<16x32xf32>, vector<16x96xf32> -> vector<16x128xf32>
    %cst_17 = arith.constant 0.000000e+00 : f32
    %32 = vector.broadcast %cst_17 : f32 to vector<16x32xf32>
    %33 = vector.extract_strided_slice %2 {offsets = [0, 32], sizes = [16, 96], strides = [1, 1]} : vector<16x128xf32> to vector<16x96xf32>
    %34 = tpu.concatenate %32, %33 in 1 : vector<16x32xf32>, vector<16x96xf32> -> vector<16x128xf32>
    %35 = tpu.concatenate %31, %34 in 0 : vector<16x128xf32>, vector<16x128xf32> -> vector<32x128xf32>
    %cst_18 = arith.constant dense<0.000000e+00> : vector<48x128xf32>
    %36 = tpu.matmul %28, %35, %cst_18 {dimension_numbers = #tpu.dot_dimension_numbers<[1], [0], [0], [1], [0, 0, 1, 1], [], []>} : vector<48x32xf32>, vector<32x128xf32>, vector<48x128xf32> -> vector<48x128xf32>
    %37 = vector.extract_strided_slice %36 {offsets = [0, 0], sizes = [48, 32], strides = [1, 1]} : vector<48x128xf32> to vector<48x32xf32>
    %38 = vector.extract_strided_slice %36 {offsets = [0, 32], sizes = [48, 32], strides = [1, 1]} : vector<48x128xf32> to vector<48x32xf32>
    %39 = vector.extract_strided_slice %36 {offsets = [0, 64], sizes = [48, 32], strides = [1, 1]} : vector<48x128xf32> to vector<48x32xf32>
    %40 = arith.mulf %38, %37 : vector<48x32xf32>
    %cst_19 = arith.constant 0.353553385 : f32
    %41 = vector.broadcast %cst_19 : f32 to vector<48x32xf32>
    %42 = arith.mulf %40, %41 : vector<48x32xf32>
    %43 = arith.mulf %42, %9 : vector<48x32xf32>
    %c0_20 = arith.constant 0 : index
    %c0_21 = arith.constant 0 : index
    %44 = vector.load %arg8[%c0_20, %c0_21] : memref<32x32xf32, #tpu.memory_space<vmem>>, vector<32x32xf32>
    %cst_22 = arith.constant dense<0.000000e+00> : vector<48x32xf32>
    %45 = tpu.matmul %43, %44, %cst_22 {dimension_numbers = #tpu.dot_dimension_numbers<[1], [0], [0], [1], [0, 0, 1, 1], [], []>} : vector<48x32xf32>, vector<32x32xf32>, vector<48x32xf32> -> vector<48x32xf32>
    %cst_23 = arith.constant -5.000000e+00 : f32
    %cst_24 = arith.constant 5.000000e+00 : f32
    %46 = vector.broadcast %cst_23 : f32 to vector<48x32xf32>
    %47 = arith.maximumf %46, %45 : vector<48x32xf32>
    %48 = vector.broadcast %cst_24 : f32 to vector<48x32xf32>
    %49 = arith.minimumf %48, %47 : vector<48x32xf32>
    %50 = math.exp %49 : vector<48x32xf32>
    %51 = arith.mulf %39, %50 : vector<48x32xf32>
    %52 = tpu.concatenate %51, %50 in 1 : vector<48x32xf32>, vector<48x32xf32> -> vector<48x64xf32>
    %cst_25 = arith.constant dense<0.000000e+00> : vector<16x64xf32>
    %53 = tpu.matmul %27, %52, %cst_25 {dimension_numbers = #tpu.dot_dimension_numbers<[1], [0], [0], [1], [0, 0, 1, 1], [], []>} : vector<16x48xf32>, vector<48x64xf32>, vector<16x64xf32> -> vector<16x64xf32>
    %54 = vector.extract_strided_slice %53 {offsets = [0, 0], sizes = [16, 32], strides = [1, 1]} : vector<16x64xf32> to vector<16x32xf32>
    %55 = vector.extract_strided_slice %53 {offsets = [0, 32], sizes = [16, 32], strides = [1, 1]} : vector<16x64xf32> to vector<16x32xf32>
    %cst_26 = arith.constant 9.99999997E-7 : f32
    %56 = vector.broadcast %cst_26 : f32 to vector<16x32xf32>
    %57 = arith.addf %55, %56 : vector<16x32xf32>
    %58 = arith.divf %54, %57 : vector<16x32xf32>
    %c0_27 = arith.constant 0 : index
    %c0_28 = arith.constant 0 : index
    %59 = vector.load %arg9[%c0_27, %c0_28] : memref<32x32xf32, #tpu.memory_space<vmem>>, vector<32x32xf32>
    %c0_29 = arith.constant 0 : index
    %c0_30 = arith.constant 0 : index
    %60 = vector.load %arg10[%c0_29, %c0_30] : memref<32x64xf32, #tpu.memory_space<vmem>>, vector<32x64xf32>
    %c0_31 = arith.constant 0 : index
    %c0_32 = arith.constant 0 : index
    %61 = vector.load %arg11[%c0_31, %c0_32] : memref<1x64xf32, #tpu.memory_space<vmem>>, vector<1x64xf32>
    %c0_33 = arith.constant 0 : index
    %c0_34 = arith.constant 0 : index
    %62 = vector.load %arg12[%c0_33, %c0_34] : memref<64x32xf32, #tpu.memory_space<vmem>>, vector<64x32xf32>
    %c0_35 = arith.constant 0 : index
    %c0_36 = arith.constant 0 : index
    %63 = vector.load %arg13[%c0_35, %c0_36] : memref<6x32xf32, #tpu.memory_space<vmem>>, vector<6x32xf32>
    %cst_37 = arith.constant dense<0.000000e+00> : vector<16x32xf32>
    %64 = tpu.matmul %58, %59, %cst_37 {dimension_numbers = #tpu.dot_dimension_numbers<[1], [0], [0], [1], [0, 0, 1, 1], [], []>} : vector<16x32xf32>, vector<32x32xf32>, vector<16x32xf32> -> vector<16x32xf32>
    %65 = vector.extract_strided_slice %63 {offsets = [0, 0], sizes = [1, 32], strides = [1, 1]} : vector<6x32xf32> to vector<1x32xf32>
    %66 = vector.broadcast %65 : vector<1x32xf32> to vector<16x32xf32>
    %67 = arith.addf %64, %66 : vector<16x32xf32>
    %68 = arith.addf %67, %0 : vector<16x32xf32>
    %69 = vector.extract_strided_slice %63 {offsets = [2, 0], sizes = [1, 32], strides = [1, 1]} : vector<6x32xf32> to vector<1x32xf32>
    %70 = vector.extract_strided_slice %63 {offsets = [3, 0], sizes = [1, 32], strides = [1, 1]} : vector<6x32xf32> to vector<1x32xf32>
    %71 = arith.mulf %68, %68 : vector<16x32xf32>
    %72 = tpu.concatenate %68, %71 in 1 : vector<16x32xf32>, vector<16x32xf32> -> vector<16x64xf32>
    %cst_38 = arith.constant dense<0.000000e+00> : vector<64xf32>
    %73 = vector.multi_reduction <add>, %72, %cst_38 [0] : vector<16x64xf32> to vector<64xf32>
    %74 = vector.shape_cast %73 : vector<64xf32> to vector<1x64xf32>
    %cst_39 = arith.constant 6.250000e-02 : f32
    %75 = vector.broadcast %cst_39 : f32 to vector<1x64xf32>
    %76 = arith.mulf %74, %75 : vector<1x64xf32>
    %77 = vector.extract_strided_slice %76 {offsets = [0, 0], sizes = [1, 32], strides = [1, 1]} : vector<1x64xf32> to vector<1x32xf32>
    %78 = vector.extract_strided_slice %76 {offsets = [0, 32], sizes = [1, 32], strides = [1, 1]} : vector<1x64xf32> to vector<1x32xf32>
    %79 = arith.mulf %77, %77 : vector<1x32xf32>
    %80 = arith.subf %78, %79 : vector<1x32xf32>
    %81 = vector.broadcast %77 : vector<1x32xf32> to vector<16x32xf32>
    %82 = arith.subf %68, %81 : vector<16x32xf32>
    %cst_40 = arith.constant 9.99999974E-6 : f32
    %83 = vector.broadcast %cst_40 : f32 to vector<1x32xf32>
    %84 = arith.addf %80, %83 : vector<1x32xf32>
    %85 = math.rsqrt %84 : vector<1x32xf32>
    %86 = vector.broadcast %85 : vector<1x32xf32> to vector<16x32xf32>
    %87 = arith.mulf %82, %86 : vector<16x32xf32>
    %88 = vector.broadcast %69 : vector<1x32xf32> to vector<16x32xf32>
    %89 = arith.mulf %87, %88 : vector<16x32xf32>
    %90 = vector.broadcast %70 : vector<1x32xf32> to vector<16x32xf32>
    %91 = arith.addf %89, %90 : vector<16x32xf32>
    %cst_41 = arith.constant dense<0.000000e+00> : vector<16x64xf32>
    %92 = tpu.matmul %91, %60, %cst_41 {dimension_numbers = #tpu.dot_dimension_numbers<[1], [0], [0], [1], [0, 0, 1, 1], [], []>} : vector<16x32xf32>, vector<32x64xf32>, vector<16x64xf32> -> vector<16x64xf32>
    %93 = vector.broadcast %61 : vector<1x64xf32> to vector<16x64xf32>
    %94 = arith.addf %92, %93 : vector<16x64xf32>
    %cst_42 = arith.constant 0.000000e+00 : f32
    %95 = vector.broadcast %cst_42 : f32 to vector<16x64xf32>
    %96 = arith.maximumf %94, %95 : vector<16x64xf32>
    %cst_43 = arith.constant dense<0.000000e+00> : vector<16x32xf32>
    %97 = tpu.matmul %96, %62, %cst_43 {dimension_numbers = #tpu.dot_dimension_numbers<[1], [0], [0], [1], [0, 0, 1, 1], [], []>} : vector<16x64xf32>, vector<64x32xf32>, vector<16x32xf32> -> vector<16x32xf32>
    %98 = vector.extract_strided_slice %63 {offsets = [1, 0], sizes = [1, 32], strides = [1, 1]} : vector<6x32xf32> to vector<1x32xf32>
    %99 = vector.broadcast %98 : vector<1x32xf32> to vector<16x32xf32>
    %100 = arith.addf %97, %99 : vector<16x32xf32>
    %101 = arith.addf %100, %91 : vector<16x32xf32>
    %102 = vector.extract_strided_slice %63 {offsets = [4, 0], sizes = [1, 32], strides = [1, 1]} : vector<6x32xf32> to vector<1x32xf32>
    %103 = vector.extract_strided_slice %63 {offsets = [5, 0], sizes = [1, 32], strides = [1, 1]} : vector<6x32xf32> to vector<1x32xf32>
    %104 = arith.mulf %101, %101 : vector<16x32xf32>
    %105 = tpu.concatenate %101, %104 in 1 : vector<16x32xf32>, vector<16x32xf32> -> vector<16x64xf32>
    %cst_44 = arith.constant dense<0.000000e+00> : vector<64xf32>
    %106 = vector.multi_reduction <add>, %105, %cst_44 [0] : vector<16x64xf32> to vector<64xf32>
    %107 = vector.shape_cast %106 : vector<64xf32> to vector<1x64xf32>
    %cst_45 = arith.constant 6.250000e-02 : f32
    %108 = vector.broadcast %cst_45 : f32 to vector<1x64xf32>
    %109 = arith.mulf %107, %108 : vector<1x64xf32>
    %110 = vector.extract_strided_slice %109 {offsets = [0, 0], sizes = [1, 32], strides = [1, 1]} : vector<1x64xf32> to vector<1x32xf32>
    %111 = vector.extract_strided_slice %109 {offsets = [0, 32], sizes = [1, 32], strides = [1, 1]} : vector<1x64xf32> to vector<1x32xf32>
    %112 = arith.mulf %110, %110 : vector<1x32xf32>
    %113 = arith.subf %111, %112 : vector<1x32xf32>
    %114 = vector.broadcast %110 : vector<1x32xf32> to vector<16x32xf32>
    %115 = arith.subf %101, %114 : vector<16x32xf32>
    %cst_46 = arith.constant 9.99999974E-6 : f32
    %116 = vector.broadcast %cst_46 : f32 to vector<1x32xf32>
    %117 = arith.addf %113, %116 : vector<1x32xf32>
    %118 = math.rsqrt %117 : vector<1x32xf32>
    %119 = vector.broadcast %118 : vector<1x32xf32> to vector<16x32xf32>
    %120 = arith.mulf %115, %119 : vector<16x32xf32>
    %121 = vector.broadcast %102 : vector<1x32xf32> to vector<16x32xf32>
    %122 = arith.mulf %120, %121 : vector<16x32xf32>
    %123 = vector.broadcast %103 : vector<1x32xf32> to vector<16x32xf32>
    %124 = arith.addf %122, %123 : vector<16x32xf32>
    %c0_47 = arith.constant 0 : index
    %c0_48 = arith.constant 0 : index
    %125 = vector.load %arg19[%c0_47, %c0_48] : memref<16x32xf32, #tpu.memory_space<vmem>>, vector<16x32xf32>
    tpu.vector_store %arg19[%c0_47, %c0_48], %124 {strides = array<i32>} : memref<16x32xf32, #tpu.memory_space<vmem>>, vector<16x32xf32>,
    %c0_49 = arith.constant 0 : index
    %c0_50 = arith.constant 0 : index
    %126 = vector.load %arg14[%c0_49, %c0_50] : memref<32x32xf32, #tpu.memory_space<vmem>>, vector<32x32xf32>
    %c0_51 = arith.constant 0 : index
    %c0_52 = arith.constant 0 : index
    %127 = vector.load %arg15[%c0_51, %c0_52] : memref<32x64xf32, #tpu.memory_space<vmem>>, vector<32x64xf32>
    %c0_53 = arith.constant 0 : index
    %c0_54 = arith.constant 0 : index
    %128 = vector.load %arg16[%c0_53, %c0_54] : memref<1x64xf32, #tpu.memory_space<vmem>>, vector<1x64xf32>
    %c0_55 = arith.constant 0 : index
    %c0_56 = arith.constant 0 : index
    %129 = vector.load %arg17[%c0_55, %c0_56] : memref<64x32xf32, #tpu.memory_space<vmem>>, vector<64x32xf32>
    %c0_57 = arith.constant 0 : index
    %c0_58 = arith.constant 0 : index
    %130 = vector.load %arg18[%c0_57, %c0_58] : memref<6x32xf32, #tpu.memory_space<vmem>>, vector<6x32xf32>
    %cst_59 = arith.constant dense<0.000000e+00> : vector<48x32xf32>
    %131 = tpu.matmul %9, %126, %cst_59 {dimension_numbers = #tpu.dot_dimension_numbers<[1], [0], [0], [1], [0, 0, 1, 1], [], []>} : vector<48x32xf32>, vector<32x32xf32>, vector<48x32xf32> -> vector<48x32xf32>
    %132 = vector.extract_strided_slice %130 {offsets = [0, 0], sizes = [1, 32], strides = [1, 1]} : vector<6x32xf32> to vector<1x32xf32>
    %133 = vector.broadcast %132 : vector<1x32xf32> to vector<48x32xf32>
    %134 = arith.addf %131, %133 : vector<48x32xf32>
    %135 = arith.addf %134, %10 : vector<48x32xf32>
    %136 = vector.extract_strided_slice %130 {offsets = [2, 0], sizes = [1, 32], strides = [1, 1]} : vector<6x32xf32> to vector<1x32xf32>
    %137 = vector.extract_strided_slice %130 {offsets = [3, 0], sizes = [1, 32], strides = [1, 1]} : vector<6x32xf32> to vector<1x32xf32>
    %138 = arith.mulf %135, %135 : vector<48x32xf32>
    %139 = tpu.concatenate %135, %138 in 1 : vector<48x32xf32>, vector<48x32xf32> -> vector<48x64xf32>
    %cst_60 = arith.constant dense<0.000000e+00> : vector<64xf32>
    %140 = vector.multi_reduction <add>, %139, %cst_60 [0] : vector<48x64xf32> to vector<64xf32>
    %141 = vector.shape_cast %140 : vector<64xf32> to vector<1x64xf32>
    %cst_61 = arith.constant 0.020833334 : f32
    %142 = vector.broadcast %cst_61 : f32 to vector<1x64xf32>
    %143 = arith.mulf %141, %142 : vector<1x64xf32>
    %144 = vector.extract_strided_slice %143 {offsets = [0, 0], sizes = [1, 32], strides = [1, 1]} : vector<1x64xf32> to vector<1x32xf32>
    %145 = vector.extract_strided_slice %143 {offsets = [0, 32], sizes = [1, 32], strides = [1, 1]} : vector<1x64xf32> to vector<1x32xf32>
    %146 = arith.mulf %144, %144 : vector<1x32xf32>
    %147 = arith.subf %145, %146 : vector<1x32xf32>
    %148 = vector.broadcast %144 : vector<1x32xf32> to vector<48x32xf32>
    %149 = arith.subf %135, %148 : vector<48x32xf32>
    %cst_62 = arith.constant 9.99999974E-6 : f32
    %150 = vector.broadcast %cst_62 : f32 to vector<1x32xf32>
    %151 = arith.addf %147, %150 : vector<1x32xf32>
    %152 = math.rsqrt %151 : vector<1x32xf32>
    %153 = vector.broadcast %152 : vector<1x32xf32> to vector<48x32xf32>
    %154 = arith.mulf %149, %153 : vector<48x32xf32>
    %155 = vector.broadcast %136 : vector<1x32xf32> to vector<48x32xf32>
    %156 = arith.mulf %154, %155 : vector<48x32xf32>
    %157 = vector.broadcast %137 : vector<1x32xf32> to vector<48x32xf32>
    %158 = arith.addf %156, %157 : vector<48x32xf32>
    %cst_63 = arith.constant dense<0.000000e+00> : vector<48x64xf32>
    %159 = tpu.matmul %158, %127, %cst_63 {dimension_numbers = #tpu.dot_dimension_numbers<[1], [0], [0], [1], [0, 0, 1, 1], [], []>} : vector<48x32xf32>, vector<32x64xf32>, vector<48x64xf32> -> vector<48x64xf32>
    %160 = vector.broadcast %128 : vector<1x64xf32> to vector<48x64xf32>
    %161 = arith.addf %159, %160 : vector<48x64xf32>
    %cst_64 = arith.constant 0.000000e+00 : f32
    %162 = vector.broadcast %cst_64 : f32 to vector<48x64xf32>
    %163 = arith.maximumf %161, %162 : vector<48x64xf32>
    %cst_65 = arith.constant dense<0.000000e+00> : vector<48x32xf32>
    %164 = tpu.matmul %163, %129, %cst_65 {dimension_numbers = #tpu.dot_dimension_numbers<[1], [0], [0], [1], [0, 0, 1, 1], [], []>} : vector<48x64xf32>, vector<64x32xf32>, vector<48x32xf32> -> vector<48x32xf32>
    %165 = vector.extract_strided_slice %130 {offsets = [1, 0], sizes = [1, 32], strides = [1, 1]} : vector<6x32xf32> to vector<1x32xf32>
    %166 = vector.broadcast %165 : vector<1x32xf32> to vector<48x32xf32>
    %167 = arith.addf %164, %166 : vector<48x32xf32>
    %168 = arith.addf %167, %158 : vector<48x32xf32>
    %169 = vector.extract_strided_slice %130 {offsets = [4, 0], sizes = [1, 32], strides = [1, 1]} : vector<6x32xf32> to vector<1x32xf32>
    %170 = vector.extract_strided_slice %130 {offsets = [5, 0], sizes = [1, 32], strides = [1, 1]} : vector<6x32xf32> to vector<1x32xf32>
    %171 = arith.mulf %168, %168 : vector<48x32xf32>
    %172 = tpu.concatenate %168, %171 in 1 : vector<48x32xf32>, vector<48x32xf32> -> vector<48x64xf32>
    %cst_66 = arith.constant dense<0.000000e+00> : vector<64xf32>
    %173 = vector.multi_reduction <add>, %172, %cst_66 [0] : vector<48x64xf32> to vector<64xf32>
    %174 = vector.shape_cast %173 : vector<64xf32> to vector<1x64xf32>
    %cst_67 = arith.constant 0.020833334 : f32
    %175 = vector.broadcast %cst_67 : f32 to vector<1x64xf32>
    %176 = arith.mulf %174, %175 : vector<1x64xf32>
    %177 = vector.extract_strided_slice %176 {offsets = [0, 0], sizes = [1, 32], strides = [1, 1]} : vector<1x64xf32> to vector<1x32xf32>
    %178 = vector.extract_strided_slice %176 {offsets = [0, 32], sizes = [1, 32], strides = [1, 1]} : vector<1x64xf32> to vector<1x32xf32>
    %179 = arith.mulf %177, %177 : vector<1x32xf32>
    %180 = arith.subf %178, %179 : vector<1x32xf32>
    %181 = vector.broadcast %177 : vector<1x32xf32> to vector<48x32xf32>
    %182 = arith.subf %168, %181 : vector<48x32xf32>
    %cst_68 = arith.constant 9.99999974E-6 : f32
    %183 = vector.broadcast %cst_68 : f32 to vector<1x32xf32>
    %184 = arith.addf %180, %183 : vector<1x32xf32>
    %185 = math.rsqrt %184 : vector<1x32xf32>
    %186 = vector.broadcast %185 : vector<1x32xf32> to vector<48x32xf32>
    %187 = arith.mulf %182, %186 : vector<48x32xf32>
    %188 = vector.broadcast %169 : vector<1x32xf32> to vector<48x32xf32>
    %189 = arith.mulf %187, %188 : vector<48x32xf32>
    %190 = vector.broadcast %170 : vector<1x32xf32> to vector<48x32xf32>
    %191 = arith.addf %189, %190 : vector<48x32xf32>
    %c0_69 = arith.constant 0 : index
    %c0_70 = arith.constant 0 : index
    %192 = vector.load %arg20[%c0_69, %c0_70] : memref<48x32xf32, #tpu.memory_space<vmem>>, vector<48x32xf32>
    tpu.vector_store %arg20[%c0_69, %c0_70], %191 {strides = array<i32>} : memref<48x32xf32, #tpu.memory_space<vmem>>, vector<48x32xf32>,
    return
  }
}

</mosaic_0001>

<llo_original>
// kernel: graph_transformer_layer.1
$region0: #{graph_transformer_layer.1}
  #allocation0 [shape = 'u32[]', space=smem, size = 0x4, offset = 0x4, fixed_abs, tag = 'smem constant byte address 0x4 - core index']
  #allocation1 [shape = 'u32[144,128]{1,0:T(1,128)}', space=vmem, size = 0x12000, scoped, tag = 'internal scratch']
  %s0 = inlined_call_operand.vmem [shape: f32[16,32], index: 0, kind: input, shape index: {}]
  %s1 = inlined_call_operand.vmem [shape: f32[48,16], index: 1, kind: input, shape index: {}]
  %s2 = inlined_call_operand.vmem [shape: s32[48,1], index: 2, kind: input, shape index: {}]
  %s3 = inlined_call_operand.vmem [shape: s32[48,1], index: 3, kind: input, shape index: {}]
  %s4 = inlined_call_operand.vmem [shape: s32[1,48], index: 4, kind: input, shape index: {}]
  %s5 = inlined_call_operand.vmem [shape: f32[32,128], index: 5, kind: input, shape index: {}]
  %s6 = inlined_call_operand.vmem [shape: f32[16,64], index: 6, kind: input, shape index: {}]
  %s7 = inlined_call_operand.vmem [shape: f32[1,64], index: 7, kind: input, shape index: {}]
  %s8 = inlined_call_operand.vmem [shape: f32[32,32], index: 8, kind: input, shape index: {}]
  %s9 = inlined_call_operand.vmem [shape: f32[32,32], index: 9, kind: input, shape index: {}]
  %s10 = inlined_call_operand.vmem [shape: f32[32,64], index: 10, kind: input, shape index: {}]
  %s11 = inlined_call_operand.vmem [shape: f32[1,64], index: 11, kind: input, shape index: {}]
  %s12 = inlined_call_operand.vmem [shape: f32[64,32], index: 12, kind: input, shape index: {}]
  %s13 = inlined_call_operand.vmem [shape: f32[6,32], index: 13, kind: input, shape index: {}]
  %s14 = inlined_call_operand.vmem [shape: f32[32,32], index: 14, kind: input, shape index: {}]
  %s15 = inlined_call_operand.vmem [shape: f32[32,64], index: 15, kind: input, shape index: {}]
  %s16 = inlined_call_operand.vmem [shape: f32[1,64], index: 16, kind: input, shape index: {}]
  %s17 = inlined_call_operand.vmem [shape: f32[64,32], index: 17, kind: input, shape index: {}]
  %s18 = inlined_call_operand.vmem [shape: f32[6,32], index: 18, kind: input, shape index: {}]
  %s19 = inlined_call_operand.hbm [shape: f32[16,32], index: 19, kind: output, shape index: {0}]
  %s20 = inlined_call_operand.vmem [shape: f32[48,32], index: 20, kind: output, shape index: {1}]
  %21 = xla_tuple %s19, %s20
  %s22 = sld [smem:[#allocation0]]
  $region94: #{graph_transformer_layer.1} parent=0
    _
  %s24 = ssub.s32 1, %s22
  %s25 = scalar_select 0, %s24, %s22
  $region1: #{graph_transformer_layer.1} parent=0
    #allocation2 [shape = 'u8[8192]{0}', space=vmem, size = 0x2000, scoped, tag = 'output window, operand 0, single buffered']
    #allocation3 [shape = 's32[1]{0}', space=sflag, size = 0x4, scoped, tag = 'scoped memory for graph_transformer_layer.1']
    %26 = vsyncpa [#allocation3], 0
    // Predicated region
    $region2: #{graph_transformer_layer.1} parent=1 // pred_check
      _
    $region3: #{graph_transformer_layer.1} parent=1 // pred_check_branch
      %28 = sbr.rel (0) target = $region5
    $region4: #{graph_transformer_layer.1} parent=1 // pred_region
      _
    $region5: #{graph_transformer_layer.1} parent=1 // pred_fallthru
      _
    // Predicated region
    $region6: #{graph_transformer_layer.1} parent=1 // pred_check
      _
    $region7: #{graph_transformer_layer.1} parent=1 // pred_check_branch
      %30 = sbr.rel (0) target = $region9
    $region8: #{graph_transformer_layer.1} parent=1 // pred_region
      _
    $region9: #{graph_transformer_layer.1} parent=1 // pred_fallthru
      _
    // Predicated region
    $region10: #{graph_transformer_layer.1} parent=1 // pred_check
      _
    $region11: #{graph_transformer_layer.1} parent=1 // pred_check_branch
      %32 = sbr.rel (0) target = $region13
    $region12: #{graph_transformer_layer.1} parent=1 // pred_region
      _
    $region13: #{graph_transformer_layer.1} parent=1 // pred_fallthru
      _
    // Predicated region
    $region14: #{graph_transformer_layer.1} parent=1 // pred_check
      _
    $region15: #{graph_transformer_layer.1} parent=1 // pred_check_branch
      %34 = sbr.rel (0) target = $region17
    $region16: #{graph_transformer_layer.1} parent=1 // pred_region
      _
    $region17: #{graph_transformer_layer.1} parent=1 // pred_fallthru
      _
    // Predicated region
    $region18: #{graph_transformer_layer.1} parent=1 // pred_check
      _
    $region19: #{graph_transformer_layer.1} parent=1 // pred_check_branch
      %36 = sbr.rel (0) target = $region21
    $region20: #{graph_transformer_layer.1} parent=1 // pred_region
      _
    $region21: #{graph_transformer_layer.1} parent=1 // pred_fallthru
      _
    // Predicated region
    $region22: #{graph_transformer_layer.1} parent=1 // pred_check
      _
    $region23: #{graph_transformer_layer.1} parent=1 // pred_check_branch
      %38 = sbr.rel (0) target = $region25
    $region24: #{graph_transformer_layer.1} parent=1 // pred_region
      _
    $region25: #{graph_transformer_layer.1} parent=1 // pred_fallthru
      _
    // Predicated region
    $region26: #{graph_transformer_layer.1} parent=1 // pred_check
      _
    $region27: #{graph_transformer_layer.1} parent=1 // pred_check_branch
      %40 = sbr.rel (0) target = $region29
    $region28: #{graph_transformer_layer.1} parent=1 // pred_region
      _
    $region29: #{graph_transformer_layer.1} parent=1 // pred_fallthru
      _
    // Predicated region
    $region30: #{graph_transformer_layer.1} parent=1 // pred_check
      _
    $region31: #{graph_transformer_layer.1} parent=1 // pred_check_branch
      %42 = sbr.rel (0) target = $region33
    $region32: #{graph_transformer_layer.1} parent=1 // pred_region
      _
    $region33: #{graph_transformer_layer.1} parent=1 // pred_fallthru
      _
    // Predicated region
    $region34: #{graph_transformer_layer.1} parent=1 // pred_check
      _
    $region35: #{graph_transformer_layer.1} parent=1 // pred_check_branch
      %44 = sbr.rel (0) target = $region37
    $region36: #{graph_transformer_layer.1} parent=1 // pred_region
      _
    $region37: #{graph_transformer_layer.1} parent=1 // pred_fallthru
      _
    // Predicated region
    $region38: #{graph_transformer_layer.1} parent=1 // pred_check
      _
    $region39: #{graph_transformer_layer.1} parent=1 // pred_check_branch
      %46 = sbr.rel (0) target = $region41
    $region40: #{graph_transformer_layer.1} parent=1 // pred_region
      _
    $region41: #{graph_transformer_layer.1} parent=1 // pred_fallthru
      _
    // Predicated region
    $region42: #{graph_transformer_layer.1} parent=1 // pred_check
      _
    $region43: #{graph_transformer_layer.1} parent=1 // pred_check_branch
      %48 = sbr.rel (0) target = $region45
    $region44: #{graph_transformer_layer.1} parent=1 // pred_region
      _
    $region45: #{graph_transformer_layer.1} parent=1 // pred_fallthru
      _
    // Predicated region
    $region46: #{graph_transformer_layer.1} parent=1 // pred_check
      _
    $region47: #{graph_transformer_layer.1} parent=1 // pred_check_branch
      %50 = sbr.rel (0) target = $region49
    $region48: #{graph_transformer_layer.1} parent=1 // pred_region
      _
    $region49: #{graph_transformer_layer.1} parent=1 // pred_fallthru
      _
    // Predicated region
    $region50: #{graph_transformer_layer.1} parent=1 // pred_check
      _
    $region51: #{graph_transformer_layer.1} parent=1 // pred_check_branch
      %52 = sbr.rel (0) target = $region53
    $region52: #{graph_transformer_layer.1} parent=1 // pred_region
      _
    $region53: #{graph_transformer_layer.1} parent=1 // pred_fallthru
      _
    // Predicated region
    $region54: #{graph_transformer_layer.1} parent=1 // pred_check
      _
    $region55: #{graph_transformer_layer.1} parent=1 // pred_check_branch
      %54 = sbr.rel (0) target = $region57
    $region56: #{graph_transformer_layer.1} parent=1 // pred_region
      _
    $region57: #{graph_transformer_layer.1} parent=1 // pred_fallthru
      _
    // Predicated region
    $region58: #{graph_transformer_layer.1} parent=1 // pred_check
      _
    $region59: #{graph_transformer_layer.1} parent=1 // pred_check_branch
      %56 = sbr.rel (0) target = $region61
    $region60: #{graph_transformer_layer.1} parent=1 // pred_region
      _
    $region61: #{graph_transformer_layer.1} parent=1 // pred_fallthru
      _
    // Predicated region
    $region62: #{graph_transformer_layer.1} parent=1 // pred_check
      _
    $region63: #{graph_transformer_layer.1} parent=1 // pred_check_branch
      %58 = sbr.rel (0) target = $region65
    $region64: #{graph_transformer_layer.1} parent=1 // pred_region
      _
    $region65: #{graph_transformer_layer.1} parent=1 // pred_fallthru
      _
    // Predicated region
    $region66: #{graph_transformer_layer.1} parent=1 // pred_check
      _
    $region67: #{graph_transformer_layer.1} parent=1 // pred_check_branch
      %60 = sbr.rel (0) target = $region69
    $region68: #{graph_transformer_layer.1} parent=1 // pred_region
      _
    $region69: #{graph_transformer_layer.1} parent=1 // pred_fallthru
      _
    // Predicated region
    $region70: #{graph_transformer_layer.1} parent=1 // pred_check
      _
    $region71: #{graph_transformer_layer.1} parent=1 // pred_check_branch
      %62 = sbr.rel (0) target = $region73
    $region72: #{graph_transformer_layer.1} parent=1 // pred_region
      _
    $region73: #{graph_transformer_layer.1} parent=1 // pred_fallthru
      _
    // Predicated region
    $region74: #{graph_transformer_layer.1} parent=1 // pred_check
      _
    $region75: #{graph_transformer_layer.1} parent=1 // pred_check_branch
      %64 = sbr.rel (0) target = $region77
    $region76: #{graph_transformer_layer.1} parent=1 // pred_region
      _
    $region77: #{graph_transformer_layer.1} parent=1 // pred_fallthru
      _
    %v65 = vld [vmem:[%s0] sm:$0xff]
    %v66 = vld [vmem:[%s0 + $0x8] sm:$0xff]
    %v67 = vld [vmem:[%s5] sm:$0xff]
    %v68 = vld [vmem:[%s5 + $0x8] sm:$0xff]
    %v69 = vld [vmem:[%s5 + $0x10] sm:$0xff]
    %v70 = vld [vmem:[%s5 + $0x18] sm:$0xff]
    %vm71 = vcmask 261120
    %v73 = vsel %vm71, %v65, 0
    %v76 = vsel %vm71, %v66, 0
    %78 = vmatprep.subr.mxu0 0.0
    %79 = vmatpush1.msra.mxu0 %v67
    %80 = vmatprep.subr.mxu0 0.0
    %81 = vmatpush1.msra.mxu0 %v68
    %82 = vmatprep.subr.mxu0 0.0
    %83 = vmatpush1.msra.mxu0 %v69
    %84 = vmatprep.subr.mxu0 0.0
    %85 = vmatpush1.msra.mxu0 %v70
    %86 = vmatprep.subr.mxu0 0.0
    %87 = vmatpush1.msra.mxu0 0.0
    %88 = vmatprep.subr.mxu0 0.0
    %89 = vmatpush1.msra.mxu0 0.0
    %90 = vmatprep.subr.mxu0 0.0
    %91 = vmatpush1.msra.mxu0 0.0
    %92 = vmatprep.subr.mxu0 0.0
    %93 = vmatpush1.msra.mxu0 0.0
    %94 = vmatprep.subr.mxu0 0.0
    %95 = vmatpush1.msra.mxu0 0.0
    %96 = vmatprep.subr.mxu0 0.0
    %97 = vmatpush1.msra.mxu0 0.0
    %98 = vmatprep.subr.mxu0 0.0
    %99 = vmatpush1.msra.mxu0 0.0
    %100 = vmatprep.subr.mxu0 0.0
    %101 = vmatpush1.msra.mxu0 0.0
    %102 = vmatprep.subr.mxu0 0.0
    %103 = vmatpush1.msra.mxu0 0.0
    %104 = vmatprep.subr.mxu0 0.0
    %105 = vmatpush1.msra.mxu0 0.0
    %106 = vmatprep.subr.mxu0 0.0
    %107 = vmatpush1.msra.mxu0 0.0
    %108 = vmatprep.subr.mxu0 0.0
    %109 = vmatpush1.msra.mxu0 0.0
    %110 = vmatprep.subr.mxu0 0.0
    %111 = vmatpush1.msra.mxu0 0.0
    %112 = vmatprep.subr.mxu0 0.0
    %113 = vmatpush1.msra.mxu0 0.0
    %114 = vmatprep.subr.mxu0 0.0
    %115 = vmatpush1.msra.mxu0 0.0
    %116 = vmatprep.subr.mxu0 0.0
    %117 = vmatpush1.msra.mxu0 0.0
    %118 = vmatprep.subr.mxu0 0.0
    %119 = vmatpush1.msra.mxu0 0.0
    %120 = vmatprep.subr.mxu0 0.0
    %121 = vmatpush1.msra.mxu0 0.0
    %122 = vmatprep.subr.mxu0 0.0
    %123 = vmatpush1.msra.mxu0 0.0
    %124 = vmatprep.subr.mxu0 0.0
    %125 = vmatpush1.msra.mxu0 0.0
    %126 = vmatprep.subr.mxu0 0.0
    %127 = vmatpush1.msra.mxu0 0.0
    %128 = vmatprep.subr.mxu0 0.0
    %129 = vmatpush1.msra.mxu0 0.0
    %130 = vmatprep.subr.mxu0 0.0
    %131 = vmatpush1.msra.mxu0 0.0
    %132 = vmatprep.subr.mxu0 0.0
    %133 = vmatpush1.msra.mxu0 0.0
    %134 = vmatprep.subr.mxu0 0.0
    %135 = vmatpush1.msra.mxu0 0.0
    %136 = vmatprep.subr.mxu0 0.0
    %137 = vmatpush1.msra.mxu0 0.0
    %138 = vmatprep.subr.mxu0 0.0
    %139 = vmatpush1.msra.mxu0 0.0
    %140 = vmatprep.subr.mxu0 0.0
    %141 = vmatpush1.msra.mxu0 0.0
    %142 = vmatprep.mubr.f32.mxu0 0.0
    %143 = vmatmul.mubr.f32.gmra.mrb[0].mxu0 %v73
    %v144 = vpop.f32.mrb[0].mxu0
    %v145 = vadd.f32 0.0, %v144
    %v146 = vpop.f32.mrb[0].mxu0
    %147 = vmatprep.mubr.f32.mxu0 0.0
    %148 = vmatmul.mubr.f32.gmra.mrb[0].mxu0 %v76
    %v149 = vpop.f32.mrb[0].mxu0
    %v150 = vadd.f32 0.0, %v149
    %v151 = vpop.f32.mrb[0].mxu0
    %152 = vdwg.mxu0
    %v153 = vld [vmem:[%s1] sm:$0xff]
    %v154 = vld [vmem:[%s1 + $0x8] sm:$0xff]
    %v155 = vld [vmem:[%s1 + $0x10] sm:$0xff]
    %v156 = vld [vmem:[%s1 + $0x18] sm:$0xff]
    %v157 = vld [vmem:[%s1 + $0x20] sm:$0xff]
    %v158 = vld [vmem:[%s1 + $0x28] sm:$0xff]
    %v159 = vld [vmem:[%s6] sm:$0xff]
    %v160 = vld [vmem:[%s6 + $0x8] sm:$0xff]
    %v161 = vld [vmem:[%s7] sm:$0x1]
    %v163 = vlaneseq
    %v164 = vshrl.u32 %v163, 7
    %v165 = vsub.s32 0, %v164
    %v166 = vrot.slane %v161, %v165
    %vm168 = vcmask 130048
    %v170 = vsel %vm168, %v153, 0
    %v173 = vsel %vm168, %v154, 0
    %v176 = vsel %vm168, %v155, 0
    %v179 = vsel %vm168, %v156, 0
    %v182 = vsel %vm168, %v157, 0
    %v185 = vsel %vm168, %v158, 0
    %187 = vmatprep.subr.mxu0 0.0
    %188 = vmatpush1.msra.mxu0 %v159
    %189 = vmatprep.subr.mxu0 0.0
    %190 = vmatpush1.msra.mxu0 %v160
    %191 = vmatprep.subr.mxu0 0.0
    %192 = vmatpush1.msra.mxu0 0.0
    %193 = vmatprep.subr.mxu0 0.0
    %194 = vmatpush1.msra.mxu0 0.0
    %195 = vmatprep.subr.mxu0 0.0
    %196 = vmatpush1.msra.mxu0 0.0
    %197 = vmatprep.subr.mxu0 0.0
    %198 = vmatpush1.msra.mxu0 0.0
    %199 = vmatprep.subr.mxu0 0.0
    %200 = vmatpush1.msra.mxu0 0.0
    %201 = vmatprep.subr.mxu0 0.0
    %202 = vmatpush1.msra.mxu0 0.0
    %203 = vmatprep.subr.mxu0 0.0
    %204 = vmatpush1.msra.mxu0 0.0
    %205 = vmatprep.subr.mxu0 0.0
    %206 = vmatpush1.msra.mxu0 0.0
    %207 = vmatprep.subr.mxu0 0.0
    %208 = vmatpush1.msra.mxu0 0.0
    %209 = vmatprep.subr.mxu0 0.0
    %210 = vmatpush1.msra.mxu0 0.0
    %211 = vmatprep.subr.mxu0 0.0
    %212 = vmatpush1.msra.mxu0 0.0
    %213 = vmatprep.subr.mxu0 0.0
    %214 = vmatpush1.msra.mxu0 0.0
    %215 = vmatprep.subr.mxu0 0.0
    %216 = vmatpush1.msra.mxu0 0.0
    %217 = vmatprep.subr.mxu0 0.0
    %218 = vmatpush1.msra.mxu0 0.0
    %219 = vmatprep.subr.mxu0 0.0
    %220 = vmatpush1.msra.mxu0 0.0
    %221 = vmatprep.subr.mxu0 0.0
    %222 = vmatpush1.msra.mxu0 0.0
    %223 = vmatprep.subr.mxu0 0.0
    %224 = vmatpush1.msra.mxu0 0.0
    %225 = vmatprep.subr.mxu0 0.0
    %226 = vmatpush1.msra.mxu0 0.0
    %227 = vmatprep.subr.mxu0 0.0
    %228 = vmatpush1.msra.mxu0 0.0
    %229 = vmatprep.subr.mxu0 0.0
    %230 = vmatpush1.msra.mxu0 0.0
    %231 = vmatprep.subr.mxu0 0.0
    %232 = vmatpush1.msra.mxu0 0.0
    %233 = vmatprep.subr.mxu0 0.0
    %234 = vmatpush1.msra.mxu0 0.0
    %235 = vmatprep.subr.mxu0 0.0
    %236 = vmatpush1.msra.mxu0 0.0
    %237 = vmatprep.subr.mxu0 0.0
    %238 = vmatpush1.msra.mxu0 0.0
    %239 = vmatprep.subr.mxu0 0.0
    %240 = vmatpush1.msra.mxu0 0.0
    %241 = vmatprep.subr.mxu0 0.0
    %242 = vmatpush1.msra.mxu0 0.0
    %243 = vmatprep.subr.mxu0 0.0
    %244 = vmatpush1.msra.mxu0 0.0
    %245 = vmatprep.subr.mxu0 0.0
    %246 = vmatpush1.msra.mxu0 0.0
    %247 = vmatprep.subr.mxu0 0.0
    %248 = vmatpush1.msra.mxu0 0.0
    %249 = vmatprep.subr.mxu0 0.0
    %250 = vmatpush1.msra.mxu0 0.0
    %251 = vmatprep.mubr.f32.mxu0 0.0
    %252 = vmatmul.mubr.f32.gmra.mrb[0].mxu0 %v170
    %v253 = vpop.f32.mrb[0].mxu0
    %v254 = vadd.f32 %v166, %v253
    %v255 = vpop.f32.mrb[0].mxu0
    %256 = vmatprep.mubr.f32.mxu0 0.0
    %257 = vmatmul.mubr.f32.gmra.mrb[0].mxu0 %v173
    %v258 = vpop.f32.mrb[0].mxu0
    %v259 = vadd.f32 %v166, %v258
    %v260 = vpop.f32.mrb[0].mxu0
    %261 = vmatprep.mubr.f32.mxu0 0.0
    %262 = vmatmul.mubr.f32.gmra.mrb[0].mxu0 %v176
    %v263 = vpop.f32.mrb[0].mxu0
    %v264 = vadd.f32 %v166, %v263
    %v265 = vpop.f32.mrb[0].mxu0
    %266 = vmatprep.mubr.f32.mxu0 0.0
    %267 = vmatmul.mubr.f32.gmra.mrb[0].mxu0 %v179
    %v268 = vpop.f32.mrb[0].mxu0
    %v269 = vadd.f32 %v166, %v268
    %v270 = vpop.f32.mrb[0].mxu0
    %271 = vmatprep.mubr.f32.mxu0 0.0
    %272 = vmatmul.mubr.f32.gmra.mrb[0].mxu0 %v182
    %v273 = vpop.f32.mrb[0].mxu0
    %v274 = vadd.f32 %v166, %v273
    %v275 = vpop.f32.mrb[0].mxu0
    %276 = vmatprep.mubr.f32.mxu0 0.0
    %277 = vmatmul.mubr.f32.gmra.mrb[0].mxu0 %v185
    %v278 = vpop.f32.mrb[0].mxu0
    %v279 = vadd.f32 %v166, %v278
    %v280 = vpop.f32.mrb[0].mxu0
    %281 = vdwg.mxu0
    %v282 = vlaneseq
    %v283 = vand.u32 %v282, 127
    %v284 = vld [vmem:[%s3] sm:$0xff]
    %v285 = vld [vmem:[%s3 + $0x8] sm:$0xff]
    %v286 = vld [vmem:[%s3 + $0x10] sm:$0xff]
    %v287 = vld [vmem:[%s3 + $0x18] sm:$0xff]
    %v288 = vld [vmem:[%s3 + $0x20] sm:$0xff]
    %v289 = vld [vmem:[%s3 + $0x28] sm:$0xff]
    %290 = vset.pattern.permute.xlu0 0
    %291 = vperm.xlu0 %290, %v284
    %v292 = vpop.permute.xlu0 %291
    %293 = vset.pattern.permute.xlu0 0
    %294 = vperm.xlu0 %293, %v285
    %v295 = vpop.permute.xlu0 %294
    %296 = vset.pattern.permute.xlu0 0
    %297 = vperm.xlu0 %296, %v286
    %v298 = vpop.permute.xlu0 %297
    %299 = vset.pattern.permute.xlu0 0
    %300 = vperm.xlu0 %299, %v287
    %v301 = vpop.permute.xlu0 %300
    %302 = vset.pattern.permute.xlu0 0
    %303 = vperm.xlu0 %302, %v288
    %v304 = vpop.permute.xlu0 %303
    %305 = vset.pattern.permute.xlu0 0
    %306 = vperm.xlu0 %305, %v289
    %v307 = vpop.permute.xlu0 %306
    %vm308 = vcmp.eq.s32.totalorder %v283, %v292
    %vm309 = vcmp.eq.s32.totalorder %v283, %v295
    %vm310 = vcmp.eq.s32.totalorder %v283, %v298
    %vm311 = vcmp.eq.s32.totalorder %v283, %v301
    %vm312 = vcmp.eq.s32.totalorder %v283, %v304
    %vm313 = vcmp.eq.s32.totalorder %v283, %v307
    %v314 = vsel %vm308, 1, 0
    %v315 = vsel %vm309, 1, 0
    %v316 = vsel %vm310, 1, 0
    %v317 = vsel %vm311, 1, 0
    %v318 = vsel %vm312, 1, 0
    %v319 = vsel %vm313, 1, 0
    %v320 = vcvt.s32.f32 %v314
    %v321 = vcvt.s32.f32 %v315
    %v322 = vcvt.s32.f32 %v316
    %v323 = vcvt.s32.f32 %v317
    %v324 = vcvt.s32.f32 %v318
    %v325 = vcvt.s32.f32 %v319
    %v326 = vld [vmem:[%s2] sm:$0xff]
    %v327 = vld [vmem:[%s2 + $0x8] sm:$0xff]
    %v328 = vld [vmem:[%s2 + $0x10] sm:$0xff]
    %v329 = vld [vmem:[%s2 + $0x18] sm:$0xff]
    %v330 = vld [vmem:[%s2 + $0x20] sm:$0xff]
    %v331 = vld [vmem:[%s2 + $0x28] sm:$0xff]
    %332 = vset.pattern.permute.xlu0 0
    %333 = vperm.xlu0 %332, %v326
    %v334 = vpop.permute.xlu0 %333
    %335 = vset.pattern.permute.xlu0 0
    %336 = vperm.xlu0 %335, %v327
    %v337 = vpop.permute.xlu0 %336
    %338 = vset.pattern.permute.xlu0 0
    %339 = vperm.xlu0 %338, %v328
    %v340 = vpop.permute.xlu0 %339
    %341 = vset.pattern.permute.xlu0 0
    %342 = vperm.xlu0 %341, %v329
    %v343 = vpop.permute.xlu0 %342
    %344 = vset.pattern.permute.xlu0 0
    %345 = vperm.xlu0 %344, %v330
    %v346 = vpop.permute.xlu0 %345
    %347 = vset.pattern.permute.xlu0 0
    %348 = vperm.xlu0 %347, %v331
    %v349 = vpop.permute.xlu0 %348
    %vm350 = vcmp.eq.s32.totalorder %v283, %v334
    %vm351 = vcmp.eq.s32.totalorder %v283, %v337
    %vm352 = vcmp.eq.s32.totalorder %v283, %v340
    %vm353 = vcmp.eq.s32.totalorder %v283, %v343
    %vm354 = vcmp.eq.s32.totalorder %v283, %v346
    %vm355 = vcmp.eq.s32.totalorder %v283, %v349
    %v356 = vsel %vm350, 1, 0
    %v357 = vsel %vm351, 1, 0
    %v358 = vsel %vm352, 1, 0
    %v359 = vsel %vm353, 1, 0
    %v360 = vsel %vm354, 1, 0
    %v361 = vsel %vm355, 1, 0
    %v362 = vcvt.s32.f32 %v356
    %v363 = vcvt.s32.f32 %v357
    %v364 = vcvt.s32.f32 %v358
    %v365 = vcvt.s32.f32 %v359
    %v366 = vcvt.s32.f32 %v360
    %v367 = vcvt.s32.f32 %v361
    %v368 = vlaneseq
    %v369 = vshrl.u32 %v368, 7
    %v370 = vadd.s32 %v369, 8
    %v371 = vld [vmem:[%s4] sm:$0x1]
    %v372 = vlaneseq
    %v373 = vshrl.u32 %v372, 7
    %v374 = vsub.s32 0, %v373
    %v375 = vrot.slane %v371, %v374
    %vm376 = vcmp.eq.s32.totalorder %v369, %v375
    %vm377 = vcmp.eq.s32.totalorder %v370, %v375
    %v378 = vsel %vm376, 1, 0
    %v379 = vsel %vm377, 1, 0
    %v380 = vcvt.s32.f32 %v378
    %v381 = vcvt.s32.f32 %v379
    %388 = vrot.lane.b32.xlu0 %v362, 16
    %v389 = vpop.permute.xlu0 %388
    %390 = vrot.lane.b32.xlu0 %v363, 16
    %v391 = vpop.permute.xlu0 %390
    %392 = vrot.lane.b32.xlu0 %v364, 16
    %v393 = vpop.permute.xlu0 %392
    %394 = vrot.lane.b32.xlu0 %v365, 16
    %v395 = vpop.permute.xlu0 %394
    %396 = vrot.lane.b32.xlu0 %v366, 16
    %v397 = vpop.permute.xlu0 %396
    %398 = vrot.lane.b32.xlu0 %v367, 16
    %v399 = vpop.permute.xlu0 %398
    %v406 = vsel %vm168, %v320, %v389
    %v407 = vsel %vm168, %v321, %v391
    %v408 = vsel %vm168, %v322, %v393
    %v409 = vsel %vm168, %v323, %v395
    %v410 = vsel %vm168, %v324, %v397
    %v411 = vsel %vm168, %v325, %v399
    %v412 = vsel %vm71, %v145, 0.0
    %v413 = vsel %vm71, %v150, 0.0
    %v414 = vsel %vm71, 0.0, %v145
    %v415 = vsel %vm71, 0.0, %v150
    %v417 = vsel %vm71, %v406, 0
    %v420 = vsel %vm71, %v407, 0
    %v423 = vsel %vm71, %v408, 0
    %v426 = vsel %vm71, %v409, 0
    %v429 = vsel %vm71, %v410, 0
    %v432 = vsel %vm71, %v411, 0
    %434 = vmatprep.subr.mxu0 0.0
    %435 = vmatpush1.msra.mxu0 %v412
    %436 = vmatprep.subr.mxu0 0.0
    %437 = vmatpush1.msra.mxu0 %v413
    %438 = vmatprep.subr.mxu0 0.0
    %439 = vmatpush1.msra.mxu0 %v414
    %440 = vmatprep.subr.mxu0 0.0
    %441 = vmatpush1.msra.mxu0 %v415
    %442 = vmatprep.subr.mxu0 0.0
    %443 = vmatpush1.msra.mxu0 0.0
    %444 = vmatprep.subr.mxu0 0.0
    %445 = vmatpush1.msra.mxu0 0.0
    %446 = vmatprep.subr.mxu0 0.0
    %447 = vmatpush1.msra.mxu0 0.0
    %448 = vmatprep.subr.mxu0 0.0
    %449 = vmatpush1.msra.mxu0 0.0
    %450 = vmatprep.subr.mxu0 0.0
    %451 = vmatpush1.msra.mxu0 0.0
    %452 = vmatprep.subr.mxu0 0.0
    %453 = vmatpush1.msra.mxu0 0.0
    %454 = vmatprep.subr.mxu0 0.0
    %455 = vmatpush1.msra.mxu0 0.0
    %456 = vmatprep.subr.mxu0 0.0
    %457 = vmatpush1.msra.mxu0 0.0
    %458 = vmatprep.subr.mxu0 0.0
    %459 = vmatpush1.msra.mxu0 0.0
    %460 = vmatprep.subr.mxu0 0.0
    %461 = vmatpush1.msra.mxu0 0.0
    %462 = vmatprep.subr.mxu0 0.0
    %463 = vmatpush1.msra.mxu0 0.0
    %464 = vmatprep.subr.mxu0 0.0
    %465 = vmatpush1.msra.mxu0 0.0
    %466 = vmatprep.subr.mxu0 0.0
    %467 = vmatpush1.msra.mxu0 0.0
    %468 = vmatprep.subr.mxu0 0.0
    %469 = vmatpush1.msra.mxu0 0.0
    %470 = vmatprep.subr.mxu0 0.0
    %471 = vmatpush1.msra.mxu0 0.0
    %472 = vmatprep.subr.mxu0 0.0
    %473 = vmatpush1.msra.mxu0 0.0
    %474 = vmatprep.subr.mxu0 0.0
    %475 = vmatpush1.msra.mxu0 0.0
    %476 = vmatprep.subr.mxu0 0.0
    %477 = vmatpush1.msra.mxu0 0.0
    %478 = vmatprep.subr.mxu0 0.0
    %479 = vmatpush1.msra.mxu0 0.0
    %480 = vmatprep.subr.mxu0 0.0
    %481 = vmatpush1.msra.mxu0 0.0
    %482 = vmatprep.subr.mxu0 0.0
    %483 = vmatpush1.msra.mxu0 0.0
    %484 = vmatprep.subr.mxu0 0.0
    %485 = vmatpush1.msra.mxu0 0.0
    %486 = vmatprep.subr.mxu0 0.0
    %487 = vmatpush1.msra.mxu0 0.0
    %488 = vmatprep.subr.mxu0 0.0
    %489 = vmatpush1.msra.mxu0 0.0
    %490 = vmatprep.subr.mxu0 0.0
    %491 = vmatpush1.msra.mxu0 0.0
    %492 = vmatprep.subr.mxu0 0.0
    %493 = vmatpush1.msra.mxu0 0.0
    %494 = vmatprep.subr.mxu0 0.0
    %495 = vmatpush1.msra.mxu0 0.0
    %496 = vmatprep.subr.mxu0 0.0
    %497 = vmatpush1.msra.mxu0 0.0
    %498 = vmatprep.mubr.f32.mxu0 0.0
    %499 = vmatmul.mubr.f32.gmra.mrb[0].mxu0 %v417
    %v500 = vpop.f32.mrb[0].mxu0
    %v501 = vadd.f32 0.0, %v500
    %v502 = vpop.f32.mrb[0].mxu0
    %503 = vmatprep.mubr.f32.mxu0 0.0
    %504 = vmatmul.mubr.f32.gmra.mrb[0].mxu0 %v420
    %v505 = vpop.f32.mrb[0].mxu0
    %v506 = vadd.f32 0.0, %v505
    %v507 = vpop.f32.mrb[0].mxu0
    %508 = vmatprep.mubr.f32.mxu0 0.0
    %509 = vmatmul.mubr.f32.gmra.mrb[0].mxu0 %v423
    %v510 = vpop.f32.mrb[0].mxu0
    %v511 = vadd.f32 0.0, %v510
    %v512 = vpop.f32.mrb[0].mxu0
    %513 = vmatprep.mubr.f32.mxu0 0.0
    %514 = vmatmul.mubr.f32.gmra.mrb[0].mxu0 %v426
    %v515 = vpop.f32.mrb[0].mxu0
    %v516 = vadd.f32 0.0, %v515
    %v517 = vpop.f32.mrb[0].mxu0
    %518 = vmatprep.mubr.f32.mxu0 0.0
    %519 = vmatmul.mubr.f32.gmra.mrb[0].mxu0 %v429
    %v520 = vpop.f32.mrb[0].mxu0
    %v521 = vadd.f32 0.0, %v520
    %v522 = vpop.f32.mrb[0].mxu0
    %523 = vmatprep.mubr.f32.mxu0 0.0
    %524 = vmatmul.mubr.f32.gmra.mrb[0].mxu0 %v432
    %v525 = vpop.f32.mrb[0].mxu0
    %v526 = vadd.f32 0.0, %v525
    %v527 = vpop.f32.mrb[0].mxu0
    %528 = vdwg.mxu0
    %535 = vrot.lane.b32.xlu0 %v501, 32
    %v536 = vpop.permute.xlu0 %535
    %537 = vrot.lane.b32.xlu0 %v506, 32
    %v538 = vpop.permute.xlu0 %537
    %539 = vrot.lane.b32.xlu0 %v511, 32
    %v540 = vpop.permute.xlu0 %539
    %541 = vrot.lane.b32.xlu0 %v516, 32
    %v542 = vpop.permute.xlu0 %541
    %543 = vrot.lane.b32.xlu0 %v521, 32
    %v544 = vpop.permute.xlu0 %543
    %545 = vrot.lane.b32.xlu0 %v526, 32
    %v546 = vpop.permute.xlu0 %545
    %v553 = vmul.f32 %v501, %v536
    %v554 = vmul.f32 %v506, %v538
    %v555 = vmul.f32 %v511, %v540
    %v556 = vmul.f32 %v516, %v542
    %v557 = vmul.f32 %v521, %v544
    %v558 = vmul.f32 %v526, %v546
    %v559 = vmul.f32 %v553, 0.35355338
    %v560 = vmul.f32 %v554, 0.35355338
    %v561 = vmul.f32 %v555, 0.35355338
    %v562 = vmul.f32 %v556, 0.35355338
    %v563 = vmul.f32 %v557, 0.35355338
    %v564 = vmul.f32 %v558, 0.35355338
    %571 = vrot.lane.b32.xlu0 %v254, 32
    %v572 = vpop.permute.xlu0 %571
    %573 = vrot.lane.b32.xlu0 %v259, 32
    %v574 = vpop.permute.xlu0 %573
    %575 = vrot.lane.b32.xlu0 %v264, 32
    %v576 = vpop.permute.xlu0 %575
    %577 = vrot.lane.b32.xlu0 %v269, 32
    %v578 = vpop.permute.xlu0 %577
    %579 = vrot.lane.b32.xlu0 %v274, 32
    %v580 = vpop.permute.xlu0 %579
    %581 = vrot.lane.b32.xlu0 %v279, 32
    %v582 = vpop.permute.xlu0 %581
    %v589 = vmul.f32 %v559, %v572
    %v590 = vmul.f32 %v560, %v574
    %v591 = vmul.f32 %v561, %v576
    %v592 = vmul.f32 %v562, %v578
    %v593 = vmul.f32 %v563, %v580
    %v594 = vmul.f32 %v564, %v582
    %v595 = vld [vmem:[%s8] sm:$0xff]
    %v596 = vld [vmem:[%s8 + $0x8] sm:$0xff]
    %v597 = vld [vmem:[%s8 + $0x10] sm:$0xff]
    %v598 = vld [vmem:[%s8 + $0x18] sm:$0xff]
    %605 = vrot.lane.b32.xlu0 %v589, 96
    %v606 = vpop.permute.xlu0 %605
    %607 = vrot.lane.b32.xlu0 %v590, 96
    %v608 = vpop.permute.xlu0 %607
    %609 = vrot.lane.b32.xlu0 %v591, 96
    %v610 = vpop.permute.xlu0 %609
    %611 = vrot.lane.b32.xlu0 %v592, 96
    %v612 = vpop.permute.xlu0 %611
    %613 = vrot.lane.b32.xlu0 %v593, 96
    %v614 = vpop.permute.xlu0 %613
    %615 = vrot.lane.b32.xlu0 %v594, 96
    %v616 = vpop.permute.xlu0 %615
    %v617 = vsel %vm71, %v606, 0
    %v619 = vsel %vm71, %v608, 0
    %v621 = vsel %vm71, %v610, 0
    %v623 = vsel %vm71, %v612, 0
    %v625 = vsel %vm71, %v614, 0
    %v627 = vsel %vm71, %v616, 0
    %629 = vmatprep.subr.mxu0 0.0
    %630 = vmatpush1.msra.mxu0 %v595
    %631 = vmatprep.subr.mxu0 0.0
    %632 = vmatpush1.msra.mxu0 %v596
    %633 = vmatprep.subr.mxu0 0.0
    %634 = vmatpush1.msra.mxu0 %v597
    %635 = vmatprep.subr.mxu0 0.0
    %636 = vmatpush1.msra.mxu0 %v598
    %637 = vmatprep.subr.mxu0 0.0
    %638 = vmatpush1.msra.mxu0 0.0
    %639 = vmatprep.subr.mxu0 0.0
    %640 = vmatpush1.msra.mxu0 0.0
    %641 = vmatprep.subr.mxu0 0.0
    %642 = vmatpush1.msra.mxu0 0.0
    %643 = vmatprep.subr.mxu0 0.0
    %644 = vmatpush1.msra.mxu0 0.0
    %645 = vmatprep.subr.mxu0 0.0
    %646 = vmatpush1.msra.mxu0 0.0
    %647 = vmatprep.subr.mxu0 0.0
    %648 = vmatpush1.msra.mxu0 0.0
    %649 = vmatprep.subr.mxu0 0.0
    %650 = vmatpush1.msra.mxu0 0.0
    %651 = vmatprep.subr.mxu0 0.0
    %652 = vmatpush1.msra.mxu0 0.0
    %653 = vmatprep.subr.mxu0 0.0
    %654 = vmatpush1.msra.mxu0 0.0
    %655 = vmatprep.subr.mxu0 0.0
    %656 = vmatpush1.msra.mxu0 0.0
    %657 = vmatprep.subr.mxu0 0.0
    %658 = vmatpush1.msra.mxu0 0.0
    %659 = vmatprep.subr.mxu0 0.0
    %660 = vmatpush1.msra.mxu0 0.0
    %661 = vmatprep.subr.mxu0 0.0
    %662 = vmatpush1.msra.mxu0 0.0
    %663 = vmatprep.subr.mxu0 0.0
    %664 = vmatpush1.msra.mxu0 0.0
    %665 = vmatprep.subr.mxu0 0.0
    %666 = vmatpush1.msra.mxu0 0.0
    %667 = vmatprep.subr.mxu0 0.0
    %668 = vmatpush1.msra.mxu0 0.0
    %669 = vmatprep.subr.mxu0 0.0
    %670 = vmatpush1.msra.mxu0 0.0
    %671 = vmatprep.subr.mxu0 0.0
    %672 = vmatpush1.msra.mxu0 0.0
    %673 = vmatprep.subr.mxu0 0.0
    %674 = vmatpush1.msra.mxu0 0.0
    %675 = vmatprep.subr.mxu0 0.0
    %676 = vmatpush1.msra.mxu0 0.0
    %677 = vmatprep.subr.mxu0 0.0
    %678 = vmatpush1.msra.mxu0 0.0
    %679 = vmatprep.subr.mxu0 0.0
    %680 = vmatpush1.msra.mxu0 0.0
    %681 = vmatprep.subr.mxu0 0.0
    %682 = vmatpush1.msra.mxu0 0.0
    %683 = vmatprep.subr.mxu0 0.0
    %684 = vmatpush1.msra.mxu0 0.0
    %685 = vmatprep.subr.mxu0 0.0
    %686 = vmatpush1.msra.mxu0 0.0
    %687 = vmatprep.subr.mxu0 0.0
    %688 = vmatpush1.msra.mxu0 0.0
    %689 = vmatprep.subr.mxu0 0.0
    %690 = vmatpush1.msra.mxu0 0.0
    %691 = vmatprep.subr.mxu0 0.0
    %692 = vmatpush1.msra.mxu0 0.0
    %693 = vmatprep.mubr.f32.mxu0 0.0
    %694 = vmatmul.mubr.f32.gmra.mrb[0].mxu0 %v617
    %v695 = vpop.f32.mrb[0].mxu0
    %v696 = vadd.f32 0.0, %v695
    %v697 = vpop.f32.mrb[0].mxu0
    %698 = vmatprep.mubr.f32.mxu0 0.0
    %699 = vmatmul.mubr.f32.gmra.mrb[0].mxu0 %v619
    %v700 = vpop.f32.mrb[0].mxu0
    %v701 = vadd.f32 0.0, %v700
    %v702 = vpop.f32.mrb[0].mxu0
    %703 = vmatprep.mubr.f32.mxu0 0.0
    %704 = vmatmul.mubr.f32.gmra.mrb[0].mxu0 %v621
    %v705 = vpop.f32.mrb[0].mxu0
    %v706 = vadd.f32 0.0, %v705
    %v707 = vpop.f32.mrb[0].mxu0
    %708 = vmatprep.mubr.f32.mxu0 0.0
    %709 = vmatmul.mubr.f32.gmra.mrb[0].mxu0 %v623
    %v710 = vpop.f32.mrb[0].mxu0
    %v711 = vadd.f32 0.0, %v710
    %v712 = vpop.f32.mrb[0].mxu0
    %713 = vmatprep.mubr.f32.mxu0 0.0
    %714 = vmatmul.mubr.f32.gmra.mrb[0].mxu0 %v625
    %v715 = vpop.f32.mrb[0].mxu0
    %v716 = vadd.f32 0.0, %v715
    %v717 = vpop.f32.mrb[0].mxu0
    %718 = vmatprep.mubr.f32.mxu0 0.0
    %719 = vmatmul.mubr.f32.gmra.mrb[0].mxu0 %v627
    %v720 = vpop.f32.mrb[0].mxu0
    %v721 = vadd.f32 0.0, %v720
    %v722 = vpop.f32.mrb[0].mxu0
    %723 = vdwg.mxu0
    %v724 = vmax.f32 %v696, -5.0
    %v725 = vmax.f32 %v701, -5.0
    %v726 = vmax.f32 %v706, -5.0
    %v727 = vmax.f32 %v711, -5.0
    %v728 = vmax.f32 %v716, -5.0
    %v729 = vmax.f32 %v721, -5.0
    %v730 = vmin.f32 %v724, 5.0
    %v731 = vmin.f32 %v725, 5.0
    %v732 = vmin.f32 %v726, 5.0
    %v733 = vmin.f32 %v727, 5.0
    %v734 = vmin.f32 %v728, 5.0
    %v735 = vmin.f32 %v729, 5.0
    %v736 = vmul.f32 %v730, 1.442695
    %v737 = vpow.pop %v736
    %v738 = vmul.f32 %v731, 1.442695
    %v739 = vpow.pop %v738
    %v740 = vmul.f32 %v732, 1.442695
    %v741 = vpow.pop %v740
    %v742 = vmul.f32 %v733, 1.442695
    %v743 = vpow.pop %v742
    %v744 = vmul.f32 %v734, 1.442695
    %v745 = vpow.pop %v744
    %v746 = vmul.f32 %v735, 1.442695
    %v747 = vpow.pop %v746
    %754 = vrot.lane.b32.xlu0 %v737, 64
    %v755 = vpop.permute.xlu0 %754
    %756 = vrot.lane.b32.xlu0 %v739, 64
    %v757 = vpop.permute.xlu0 %756
    %758 = vrot.lane.b32.xlu0 %v741, 64
    %v759 = vpop.permute.xlu0 %758
    %760 = vrot.lane.b32.xlu0 %v743, 64
    %v761 = vpop.permute.xlu0 %760
    %762 = vrot.lane.b32.xlu0 %v745, 64
    %v763 = vpop.permute.xlu0 %762
    %764 = vrot.lane.b32.xlu0 %v747, 64
    %v765 = vpop.permute.xlu0 %764
    %v772 = vmul.f32 %v501, %v755
    %v773 = vmul.f32 %v506, %v757
    %v774 = vmul.f32 %v511, %v759
    %v775 = vmul.f32 %v516, %v761
    %v776 = vmul.f32 %v521, %v763
    %v777 = vmul.f32 %v526, %v765
    %784 = vrot.lane.b32.xlu0 %v772, 64
    %v785 = vpop.permute.xlu0 %784
    %786 = vrot.lane.b32.xlu0 %v773, 64
    %v787 = vpop.permute.xlu0 %786
    %788 = vrot.lane.b32.xlu0 %v774, 64
    %v789 = vpop.permute.xlu0 %788
    %790 = vrot.lane.b32.xlu0 %v775, 64
    %v791 = vpop.permute.xlu0 %790
    %792 = vrot.lane.b32.xlu0 %v776, 64
    %v793 = vpop.permute.xlu0 %792
    %794 = vrot.lane.b32.xlu0 %v777, 64
    %v795 = vpop.permute.xlu0 %794
    %802 = vrot.lane.b32.xlu0 %v737, 32
    %v803 = vpop.permute.xlu0 %802
    %804 = vrot.lane.b32.xlu0 %v739, 32
    %v805 = vpop.permute.xlu0 %804
    %806 = vrot.lane.b32.xlu0 %v741, 32
    %v807 = vpop.permute.xlu0 %806
    %808 = vrot.lane.b32.xlu0 %v743, 32
    %v809 = vpop.permute.xlu0 %808
    %810 = vrot.lane.b32.xlu0 %v745, 32
    %v811 = vpop.permute.xlu0 %810
    %812 = vrot.lane.b32.xlu0 %v747, 32
    %v813 = vpop.permute.xlu0 %812
    %v820 = vsel %vm71, %v785, %v803
    %v821 = vsel %vm71, %v787, %v805
    %v822 = vsel %vm71, %v789, %v807
    %v823 = vsel %vm71, %v791, %v809
    %v824 = vsel %vm71, %v793, %v811
    %v825 = vsel %vm71, %v795, %v813
    %vm826 = vcmask 392192
    %v828 = vsel %vm826, %v380, 0
    %v831 = vsel %vm826, %v381, 0
    %833 = vmatprep.subr.mxu0 0.0
    %834 = vmatpush1.msra.mxu0 %v820
    %835 = vmatprep.subr.mxu0 0.0
    %836 = vmatpush1.msra.mxu0 %v821
    %837 = vmatprep.subr.mxu0 0.0
    %838 = vmatpush1.msra.mxu0 %v822
    %839 = vmatprep.subr.mxu0 0.0
    %840 = vmatpush1.msra.mxu0 %v823
    %841 = vmatprep.subr.mxu0 0.0
    %842 = vmatpush1.msra.mxu0 %v824
    %843 = vmatprep.subr.mxu0 0.0
    %844 = vmatpush1.msra.mxu0 %v825
    %845 = vmatprep.subr.mxu0 0.0
    %846 = vmatpush1.msra.mxu0 0.0
    %847 = vmatprep.subr.mxu0 0.0
    %848 = vmatpush1.msra.mxu0 0.0
    %849 = vmatprep.subr.mxu0 0.0
    %850 = vmatpush1.msra.mxu0 0.0
    %851 = vmatprep.subr.mxu0 0.0
    %852 = vmatpush1.msra.mxu0 0.0
    %853 = vmatprep.subr.mxu0 0.0
    %854 = vmatpush1.msra.mxu0 0.0
    %855 = vmatprep.subr.mxu0 0.0
    %856 = vmatpush1.msra.mxu0 0.0
    %857 = vmatprep.subr.mxu0 0.0
    %858 = vmatpush1.msra.mxu0 0.0
    %859 = vmatprep.subr.mxu0 0.0
    %860 = vmatpush1.msra.mxu0 0.0
    %861 = vmatprep.subr.mxu0 0.0
    %862 = vmatpush1.msra.mxu0 0.0
    %863 = vmatprep.subr.mxu0 0.0
    %864 = vmatpush1.msra.mxu0 0.0
    %865 = vmatprep.subr.mxu0 0.0
    %866 = vmatpush1.msra.mxu0 0.0
    %867 = vmatprep.subr.mxu0 0.0
    %868 = vmatpush1.msra.mxu0 0.0
    %869 = vmatprep.subr.mxu0 0.0
    %870 = vmatpush1.msra.mxu0 0.0
    %871 = vmatprep.subr.mxu0 0.0
    %872 = vmatpush1.msra.mxu0 0.0
    %873 = vmatprep.subr.mxu0 0.0
    %874 = vmatpush1.msra.mxu0 0.0
    %875 = vmatprep.subr.mxu0 0.0
    %876 = vmatpush1.msra.mxu0 0.0
    %877 = vmatprep.subr.mxu0 0.0
    %878 = vmatpush1.msra.mxu0 0.0
    %879 = vmatprep.subr.mxu0 0.0
    %880 = vmatpush1.msra.mxu0 0.0
    %881 = vmatprep.subr.mxu0 0.0
    %882 = vmatpush1.msra.mxu0 0.0
    %883 = vmatprep.subr.mxu0 0.0
    %884 = vmatpush1.msra.mxu0 0.0
    %885 = vmatprep.subr.mxu0 0.0
    %886 = vmatpush1.msra.mxu0 0.0
    %887 = vmatprep.subr.mxu0 0.0
    %888 = vmatpush1.msra.mxu0 0.0
    %889 = vmatprep.subr.mxu0 0.0
    %890 = vmatpush1.msra.mxu0 0.0
    %891 = vmatprep.subr.mxu0 0.0
    %892 = vmatpush1.msra.mxu0 0.0
    %893 = vmatprep.subr.mxu0 0.0
    %894 = vmatpush1.msra.mxu0 0.0
    %895 = vmatprep.subr.mxu0 0.0
    %896 = vmatpush1.msra.mxu0 0.0
    %897 = vmatprep.mubr.f32.mxu0 0.0
    %898 = vmatmul.mubr.f32.gmra.mrb[0].mxu0 %v828
    %v899 = vpop.f32.mrb[0].mxu0
    %v900 = vadd.f32 0.0, %v899
    %v901 = vpop.f32.mrb[0].mxu0
    %902 = vmatprep.mubr.f32.mxu0 0.0
    %903 = vmatmul.mubr.f32.gmra.mrb[0].mxu0 %v831
    %v904 = vpop.f32.mrb[0].mxu0
    %v905 = vadd.f32 0.0, %v904
    %v906 = vpop.f32.mrb[0].mxu0
    %907 = vdwg.mxu0
    %v908 = vadd.f32 %v900, 1e-06
    %v909 = vadd.f32 %v905, 1e-06
    %912 = vrot.lane.b32.xlu0 %v908, 96
    %v913 = vpop.permute.xlu0 %912
    %914 = vrot.lane.b32.xlu0 %v909, 96
    %v915 = vpop.permute.xlu0 %914
    %v918 = vrcp.pop %v913
    %v919 = vmul.f32 %v900, %v918
    %v920 = vrcp.pop %v915
    %v921 = vmul.f32 %v905, %v920
    %v922 = vld [vmem:[%s9] sm:$0xff]
    %v923 = vld [vmem:[%s9 + $0x8] sm:$0xff]
    %v924 = vld [vmem:[%s9 + $0x10] sm:$0xff]
    %v925 = vld [vmem:[%s9 + $0x18] sm:$0xff]
    %v926 = vld [vmem:[%s10] sm:$0xff]
    %v927 = vld [vmem:[%s10 + $0x8] sm:$0xff]
    %v928 = vld [vmem:[%s10 + $0x10] sm:$0xff]
    %v929 = vld [vmem:[%s10 + $0x18] sm:$0xff]
    %v930 = vld [vmem:[%s11] sm:$0x1]
    %v931 = vld [vmem:[%s12] sm:$0xff]
    %v932 = vld [vmem:[%s12 + $0x8] sm:$0xff]
    %v933 = vld [vmem:[%s12 + $0x10] sm:$0xff]
    %v934 = vld [vmem:[%s12 + $0x18] sm:$0xff]
    %v935 = vld [vmem:[%s12 + $0x20] sm:$0xff]
    %v936 = vld [vmem:[%s12 + $0x28] sm:$0xff]
    %v937 = vld [vmem:[%s12 + $0x30] sm:$0xff]
    %v938 = vld [vmem:[%s12 + $0x38] sm:$0xff]
    %v939 = vld [vmem:[%s13] sm:$0x3f]
    %v940 = vlaneseq
    %v941 = vshrl.u32 %v940, 7
    %v942 = vsub.s32 0, %v941
    %v943 = vrot.slane %v939, %v942
    %v945 = vsel %vm71, %v919, 0
    %v948 = vsel %vm71, %v921, 0
    %950 = vmatprep.subr.mxu0 0.0
    %951 = vmatpush1.msra.mxu0 %v922
    %952 = vmatprep.subr.mxu0 0.0
    %953 = vmatpush1.msra.mxu0 %v923
    %954 = vmatprep.subr.mxu0 0.0
    %955 = vmatpush1.msra.mxu0 %v924
    %956 = vmatprep.subr.mxu0 0.0
    %957 = vmatpush1.msra.mxu0 %v925
    %958 = vmatprep.subr.mxu0 0.0
    %959 = vmatpush1.msra.mxu0 0.0
    %960 = vmatprep.subr.mxu0 0.0
    %961 = vmatpush1.msra.mxu0 0.0
    %962 = vmatprep.subr.mxu0 0.0
    %963 = vmatpush1.msra.mxu0 0.0
    %964 = vmatprep.subr.mxu0 0.0
    %965 = vmatpush1.msra.mxu0 0.0
    %966 = vmatprep.subr.mxu0 0.0
    %967 = vmatpush1.msra.mxu0 0.0
    %968 = vmatprep.subr.mxu0 0.0
    %969 = vmatpush1.msra.mxu0 0.0
    %970 = vmatprep.subr.mxu0 0.0
    %971 = vmatpush1.msra.mxu0 0.0
    %972 = vmatprep.subr.mxu0 0.0
    %973 = vmatpush1.msra.mxu0 0.0
    %974 = vmatprep.subr.mxu0 0.0
    %975 = vmatpush1.msra.mxu0 0.0
    %976 = vmatprep.subr.mxu0 0.0
    %977 = vmatpush1.msra.mxu0 0.0
    %978 = vmatprep.subr.mxu0 0.0
    %979 = vmatpush1.msra.mxu0 0.0
    %980 = vmatprep.subr.mxu0 0.0
    %981 = vmatpush1.msra.mxu0 0.0
    %982 = vmatprep.subr.mxu0 0.0
    %983 = vmatpush1.msra.mxu0 0.0
    %984 = vmatprep.subr.mxu0 0.0
    %985 = vmatpush1.msra.mxu0 0.0
    %986 = vmatprep.subr.mxu0 0.0
    %987 = vmatpush1.msra.mxu0 0.0
    %988 = vmatprep.subr.mxu0 0.0
    %989 = vmatpush1.msra.mxu0 0.0
    %990 = vmatprep.subr.mxu0 0.0
    %991 = vmatpush1.msra.mxu0 0.0
    %992 = vmatprep.subr.mxu0 0.0
    %993 = vmatpush1.msra.mxu0 0.0
    %994 = vmatprep.subr.mxu0 0.0
    %995 = vmatpush1.msra.mxu0 0.0
    %996 = vmatprep.subr.mxu0 0.0
    %997 = vmatpush1.msra.mxu0 0.0
    %998 = vmatprep.subr.mxu0 0.0
    %999 = vmatpush1.msra.mxu0 0.0
    %1000 = vmatprep.subr.mxu0 0.0
    %1001 = vmatpush1.msra.mxu0 0.0
    %1002 = vmatprep.subr.mxu0 0.0
    %1003 = vmatpush1.msra.mxu0 0.0
    %1004 = vmatprep.subr.mxu0 0.0
    %1005 = vmatpush1.msra.mxu0 0.0
    %1006 = vmatprep.subr.mxu0 0.0
    %1007 = vmatpush1.msra.mxu0 0.0
    %1008 = vmatprep.subr.mxu0 0.0
    %1009 = vmatpush1.msra.mxu0 0.0
    %1010 = vmatprep.subr.mxu0 0.0
    %1011 = vmatpush1.msra.mxu0 0.0
    %1012 = vmatprep.subr.mxu0 0.0
    %1013 = vmatpush1.msra.mxu0 0.0
    %1014 = vmatprep.mubr.f32.mxu0 0.0
    %1015 = vmatmul.mubr.f32.gmra.mrb[0].mxu0 %v945
    %v1016 = vpop.f32.mrb[0].mxu0
    %v1017 = vadd.f32 %v943, %v1016
    %v1018 = vpop.f32.mrb[0].mxu0
    %1019 = vmatprep.mubr.f32.mxu0 0.0
    %1020 = vmatmul.mubr.f32.gmra.mrb[0].mxu0 %v948
    %v1021 = vpop.f32.mrb[0].mxu0
    %v1022 = vadd.f32 %v943, %v1021
    %v1023 = vpop.f32.mrb[0].mxu0
    %1024 = vdwg.mxu0
    %v1025 = vadd.f32 %v1017, %v65
    %v1026 = vadd.f32 %v1022, %v66
    %v1027 = vmul.f32 %v1025, %v1025
    %v1028 = vmul.f32 %v1026, %v1026
    %1031 = vrot.lane.b32.xlu0 %v1027, 32
    %v1032 = vpop.permute.xlu0 %1031
    %1033 = vrot.lane.b32.xlu0 %v1028, 32
    %v1034 = vpop.permute.xlu0 %1033
    %v1037 = vsel %vm71, %v1025, %v1032
    %v1038 = vsel %vm71, %v1026, %v1034
    %vm1039 = vcmask 523264
    %v1040 = vsel %vm1039, %v1037, 0.0
    %v1041 = vsel %vm1039, %v1038, 0.0
    %v1042 = vadd.f32 %v1040, %v1041
    %v1043 = vrot.slane %v1042, 4
    %v1044 = vadd.f32 %v1042, %v1043
    %v1045 = vrot.slane %v1044, 2
    %v1046 = vadd.f32 %v1044, %v1045
    %v1047 = vrot.slane %v1046, 1
    %v1048 = vadd.f32 %v1046, %v1047
    %v1049 = vmul.f32 %v1048, 0.0625
    %v1050 = vmul.f32 %v1049, %v1049
    %1052 = vrot.lane.b32.xlu0 %v1050, 32
    %v1053 = vpop.permute.xlu0 %1052
    %v1055 = vsub.f32 %v1049, %v1053
    %v1056 = vsub.f32 %v1025, %v1049
    %v1057 = vsub.f32 %v1026, %v1049
    %v1058 = vadd.f32 %v1055, 1e-05
    %v1059 = vrsqrt.pop %v1058
    %v1060 = vlaneseq
    %v1061 = vshrl.u32 %v1060, 7
    %v1062 = vsub.s32 0, %v1061
    %v1063 = vrot.slane %v1059, %v1062
    %1065 = vrot.lane.b32.xlu0 %v1063, 96
    %v1066 = vpop.permute.xlu0 %1065
    %v1068 = vmul.f32 %v1056, %v1066
    %v1069 = vmul.f32 %v1057, %v1066
    %v1070 = vlaneseq
    %v1071 = vshrl.u32 %v1070, 7
    %v1072 = vsub.s32 2, %v1071
    %v1073 = vrot.slane %v939, %v1072
    %v1074 = vmul.f32 %v1068, %v1073
    %v1075 = vmul.f32 %v1069, %v1073
    %v1076 = vlaneseq
    %v1077 = vshrl.u32 %v1076, 7
    %v1078 = vsub.s32 3, %v1077
    %v1079 = vrot.slane %v939, %v1078
    %v1080 = vadd.f32 %v1074, %v1079
    %v1081 = vadd.f32 %v1075, %v1079
    %v1083 = vlaneseq
    %v1084 = vshrl.u32 %v1083, 7
    %v1085 = vsub.s32 0, %v1084
    %v1086 = vrot.slane %v930, %v1085
    %v1089 = vsel %vm71, %v1080, 0
    %v1092 = vsel %vm71, %v1081, 0
    %1094 = vmatprep.subr.mxu0 0.0
    %1095 = vmatpush1.msra.mxu0 %v926
    %1096 = vmatprep.subr.mxu0 0.0
    %1097 = vmatpush1.msra.mxu0 %v927
    %1098 = vmatprep.subr.mxu0 0.0
    %1099 = vmatpush1.msra.mxu0 %v928
    %1100 = vmatprep.subr.mxu0 0.0
    %1101 = vmatpush1.msra.mxu0 %v929
    %1102 = vmatprep.subr.mxu0 0.0
    %1103 = vmatpush1.msra.mxu0 0.0
    %1104 = vmatprep.subr.mxu0 0.0
    %1105 = vmatpush1.msra.mxu0 0.0
    %1106 = vmatprep.subr.mxu0 0.0
    %1107 = vmatpush1.msra.mxu0 0.0
    %1108 = vmatprep.subr.mxu0 0.0
    %1109 = vmatpush1.msra.mxu0 0.0
    %1110 = vmatprep.subr.mxu0 0.0
    %1111 = vmatpush1.msra.mxu0 0.0
    %1112 = vmatprep.subr.mxu0 0.0
    %1113 = vmatpush1.msra.mxu0 0.0
    %1114 = vmatprep.subr.mxu0 0.0
    %1115 = vmatpush1.msra.mxu0 0.0
    %1116 = vmatprep.subr.mxu0 0.0
    %1117 = vmatpush1.msra.mxu0 0.0
    %1118 = vmatprep.subr.mxu0 0.0
    %1119 = vmatpush1.msra.mxu0 0.0
    %1120 = vmatprep.subr.mxu0 0.0
    %1121 = vmatpush1.msra.mxu0 0.0
    %1122 = vmatprep.subr.mxu0 0.0
    %1123 = vmatpush1.msra.mxu0 0.0
    %1124 = vmatprep.subr.mxu0 0.0
    %1125 = vmatpush1.msra.mxu0 0.0
    %1126 = vmatprep.subr.mxu0 0.0
    %1127 = vmatpush1.msra.mxu0 0.0
    %1128 = vmatprep.subr.mxu0 0.0
    %1129 = vmatpush1.msra.mxu0 0.0
    %1130 = vmatprep.subr.mxu0 0.0
    %1131 = vmatpush1.msra.mxu0 0.0
    %1132 = vmatprep.subr.mxu0 0.0
    %1133 = vmatpush1.msra.mxu0 0.0
    %1134 = vmatprep.subr.mxu0 0.0
    %1135 = vmatpush1.msra.mxu0 0.0
    %1136 = vmatprep.subr.mxu0 0.0
    %1137 = vmatpush1.msra.mxu0 0.0
    %1138 = vmatprep.subr.mxu0 0.0
    %1139 = vmatpush1.msra.mxu0 0.0
    %1140 = vmatprep.subr.mxu0 0.0
    %1141 = vmatpush1.msra.mxu0 0.0
    %1142 = vmatprep.subr.mxu0 0.0
    %1143 = vmatpush1.msra.mxu0 0.0
    %1144 = vmatprep.subr.mxu0 0.0
    %1145 = vmatpush1.msra.mxu0 0.0
    %1146 = vmatprep.subr.mxu0 0.0
    %1147 = vmatpush1.msra.mxu0 0.0
    %1148 = vmatprep.subr.mxu0 0.0
    %1149 = vmatpush1.msra.mxu0 0.0
    %1150 = vmatprep.subr.mxu0 0.0
    %1151 = vmatpush1.msra.mxu0 0.0
    %1152 = vmatprep.subr.mxu0 0.0
    %1153 = vmatpush1.msra.mxu0 0.0
    %1154 = vmatprep.subr.mxu0 0.0
    %1155 = vmatpush1.msra.mxu0 0.0
    %1156 = vmatprep.subr.mxu0 0.0
    %1157 = vmatpush1.msra.mxu0 0.0
    %1158 = vmatprep.mubr.f32.mxu0 0.0
    %1159 = vmatmul.mubr.f32.gmra.mrb[0].mxu0 %v1089
    %v1160 = vpop.f32.mrb[0].mxu0
    %v1161 = vadd.f32 %v1086, %v1160
    %v1162 = vpop.f32.mrb[0].mxu0
    %1163 = vmatprep.mubr.f32.mxu0 0.0
    %1164 = vmatmul.mubr.f32.gmra.mrb[0].mxu0 %v1092
    %v1165 = vpop.f32.mrb[0].mxu0
    %v1166 = vadd.f32 %v1086, %v1165
    %v1167 = vpop.f32.mrb[0].mxu0
    %1168 = vdwg.mxu0
    %v1169 = vmax.f32 %v1161, 0.0
    %v1170 = vmax.f32 %v1166, 0.0
    %v1171 = vlaneseq
    %v1172 = vshrl.u32 %v1171, 7
    %v1173 = vsub.s32 1, %v1172
    %v1174 = vrot.slane %v939, %v1173
    %v1176 = vsel %vm1039, %v1169, 0
    %v1179 = vsel %vm1039, %v1170, 0
    %1181 = vmatprep.subr.mxu0 0.0
    %1182 = vmatpush1.msra.mxu0 %v931
    %1183 = vmatprep.subr.mxu0 0.0
    %1184 = vmatpush1.msra.mxu0 %v932
    %1185 = vmatprep.subr.mxu0 0.0
    %1186 = vmatpush1.msra.mxu0 %v933
    %1187 = vmatprep.subr.mxu0 0.0
    %1188 = vmatpush1.msra.mxu0 %v934
    %1189 = vmatprep.subr.mxu0 0.0
    %1190 = vmatpush1.msra.mxu0 %v935
    %1191 = vmatprep.subr.mxu0 0.0
    %1192 = vmatpush1.msra.mxu0 %v936
    %1193 = vmatprep.subr.mxu0 0.0
    %1194 = vmatpush1.msra.mxu0 %v937
    %1195 = vmatprep.subr.mxu0 0.0
    %1196 = vmatpush1.msra.mxu0 %v938
    %1197 = vmatprep.subr.mxu0 0.0
    %1198 = vmatpush1.msra.mxu0 0.0
    %1199 = vmatprep.subr.mxu0 0.0
    %1200 = vmatpush1.msra.mxu0 0.0
    %1201 = vmatprep.subr.mxu0 0.0
    %1202 = vmatpush1.msra.mxu0 0.0
    %1203 = vmatprep.subr.mxu0 0.0
    %1204 = vmatpush1.msra.mxu0 0.0
    %1205 = vmatprep.subr.mxu0 0.0
    %1206 = vmatpush1.msra.mxu0 0.0
    %1207 = vmatprep.subr.mxu0 0.0
    %1208 = vmatpush1.msra.mxu0 0.0
    %1209 = vmatprep.subr.mxu0 0.0
    %1210 = vmatpush1.msra.mxu0 0.0
    %1211 = vmatprep.subr.mxu0 0.0
    %1212 = vmatpush1.msra.mxu0 0.0
    %1213 = vmatprep.subr.mxu0 0.0
    %1214 = vmatpush1.msra.mxu0 0.0
    %1215 = vmatprep.subr.mxu0 0.0
    %1216 = vmatpush1.msra.mxu0 0.0
    %1217 = vmatprep.subr.mxu0 0.0
    %1218 = vmatpush1.msra.mxu0 0.0
    %1219 = vmatprep.subr.mxu0 0.0
    %1220 = vmatpush1.msra.mxu0 0.0
    %1221 = vmatprep.subr.mxu0 0.0
    %1222 = vmatpush1.msra.mxu0 0.0
    %1223 = vmatprep.subr.mxu0 0.0
    %1224 = vmatpush1.msra.mxu0 0.0
    %1225 = vmatprep.subr.mxu0 0.0
    %1226 = vmatpush1.msra.mxu0 0.0
    %1227 = vmatprep.subr.mxu0 0.0
    %1228 = vmatpush1.msra.mxu0 0.0
    %1229 = vmatprep.subr.mxu0 0.0
    %1230 = vmatpush1.msra.mxu0 0.0
    %1231 = vmatprep.subr.mxu0 0.0
    %1232 = vmatpush1.msra.mxu0 0.0
    %1233 = vmatprep.subr.mxu0 0.0
    %1234 = vmatpush1.msra.mxu0 0.0
    %1235 = vmatprep.subr.mxu0 0.0
    %1236 = vmatpush1.msra.mxu0 0.0
    %1237 = vmatprep.subr.mxu0 0.0
    %1238 = vmatpush1.msra.mxu0 0.0
    %1239 = vmatprep.subr.mxu0 0.0
    %1240 = vmatpush1.msra.mxu0 0.0
    %1241 = vmatprep.subr.mxu0 0.0
    %1242 = vmatpush1.msra.mxu0 0.0
    %1243 = vmatprep.subr.mxu0 0.0
    %1244 = vmatpush1.msra.mxu0 0.0
    %1245 = vmatprep.mubr.f32.mxu0 0.0
    %1246 = vmatmul.mubr.f32.gmra.mrb[0].mxu0 %v1176
    %v1247 = vpop.f32.mrb[0].mxu0
    %v1248 = vadd.f32 %v1174, %v1247
    %v1249 = vpop.f32.mrb[0].mxu0
    %1250 = vmatprep.mubr.f32.mxu0 0.0
    %1251 = vmatmul.mubr.f32.gmra.mrb[0].mxu0 %v1179
    %v1252 = vpop.f32.mrb[0].mxu0
    %v1253 = vadd.f32 %v1174, %v1252
    %v1254 = vpop.f32.mrb[0].mxu0
    %1255 = vdwg.mxu0
    %v1256 = vadd.f32 %v1248, %v1080
    %v1257 = vadd.f32 %v1253, %v1081
    %v1258 = vmul.f32 %v1256, %v1256
    %v1259 = vmul.f32 %v1257, %v1257
    %1262 = vrot.lane.b32.xlu0 %v1258, 32
    %v1263 = vpop.permute.xlu0 %1262
    %1264 = vrot.lane.b32.xlu0 %v1259, 32
    %v1265 = vpop.permute.xlu0 %1264
    %v1268 = vsel %vm71, %v1256, %v1263
    %v1269 = vsel %vm71, %v1257, %v1265
    %v1270 = vsel %vm1039, %v1268, 0.0
    %v1271 = vsel %vm1039, %v1269, 0.0
    %v1272 = vadd.f32 %v1270, %v1271
    %v1273 = vrot.slane %v1272, 4
    %v1274 = vadd.f32 %v1272, %v1273
    %v1275 = vrot.slane %v1274, 2
    %v1276 = vadd.f32 %v1274, %v1275
    %v1277 = vrot.slane %v1276, 1
    %v1278 = vadd.f32 %v1276, %v1277
    %v1279 = vmul.f32 %v1278, 0.0625
    %v1280 = vmul.f32 %v1279, %v1279
    %1282 = vrot.lane.b32.xlu0 %v1280, 32
    %v1283 = vpop.permute.xlu0 %1282
    %v1285 = vsub.f32 %v1279, %v1283
    %v1286 = vsub.f32 %v1256, %v1279
    %v1287 = vsub.f32 %v1257, %v1279
    %v1288 = vadd.f32 %v1285, 1e-05
    %v1289 = vrsqrt.pop %v1288
    %v1290 = vlaneseq
    %v1291 = vshrl.u32 %v1290, 7
    %v1292 = vsub.s32 0, %v1291
    %v1293 = vrot.slane %v1289, %v1292
    %1295 = vrot.lane.b32.xlu0 %v1293, 96
    %v1296 = vpop.permute.xlu0 %1295
    %v1298 = vmul.f32 %v1286, %v1296
    %v1299 = vmul.f32 %v1287, %v1296
    %v1300 = vlaneseq
    %v1301 = vshrl.u32 %v1300, 7
    %v1302 = vsub.s32 4, %v1301
    %v1303 = vrot.slane %v939, %v1302
    %v1304 = vmul.f32 %v1298, %v1303
    %v1305 = vmul.f32 %v1299, %v1303
    %v1306 = vlaneseq
    %v1307 = vshrl.u32 %v1306, 7
    %v1308 = vsub.s32 5, %v1307
    %v1309 = vrot.slane %v939, %v1308
    %v1310 = vadd.f32 %v1304, %v1309
    %v1311 = vadd.f32 %v1305, %v1309
    %1312 = vst.msk [vmem:[#allocation2] sm:$0xff] %vm71, %v1310
    %1313 = vst.msk [vmem:[#allocation2 + $0x8] sm:$0xff] %vm71, %v1311
    %v1314 = vld [vmem:[%s14] sm:$0xff]
    %v1315 = vld [vmem:[%s14 + $0x8] sm:$0xff]
    %v1316 = vld [vmem:[%s14 + $0x10] sm:$0xff]
    %v1317 = vld [vmem:[%s14 + $0x18] sm:$0xff]
    %v1318 = vld [vmem:[%s15] sm:$0xff]
    %v1319 = vld [vmem:[%s15 + $0x8] sm:$0xff]
    %v1320 = vld [vmem:[%s15 + $0x10] sm:$0xff]
    %v1321 = vld [vmem:[%s15 + $0x18] sm:$0xff]
    %v1322 = vld [vmem:[%s16] sm:$0x1]
    %v1323 = vld [vmem:[%s17] sm:$0xff]
    %v1324 = vld [vmem:[%s17 + $0x8] sm:$0xff]
    %v1325 = vld [vmem:[%s17 + $0x10] sm:$0xff]
    %v1326 = vld [vmem:[%s17 + $0x18] sm:$0xff]
    %v1327 = vld [vmem:[%s17 + $0x20] sm:$0xff]
    %v1328 = vld [vmem:[%s17 + $0x28] sm:$0xff]
    %v1329 = vld [vmem:[%s17 + $0x30] sm:$0xff]
    %v1330 = vld [vmem:[%s17 + $0x38] sm:$0xff]
    %v1331 = vld [vmem:[%s18] sm:$0x3f]
    %v1332 = vlaneseq
    %v1333 = vshrl.u32 %v1332, 7
    %v1334 = vsub.s32 0, %v1333
    %v1335 = vrot.slane %v1331, %v1334
    %v1336 = vsel %vm71, %v254, 0
    %v1338 = vsel %vm71, %v259, 0
    %v1340 = vsel %vm71, %v264, 0
    %v1342 = vsel %vm71, %v269, 0
    %v1344 = vsel %vm71, %v274, 0
    %v1346 = vsel %vm71, %v279, 0
    %1348 = vmatprep.subr.mxu0 0.0
    %1349 = vmatpush1.msra.mxu0 %v1314
    %1350 = vmatprep.subr.mxu0 0.0
    %1351 = vmatpush1.msra.mxu0 %v1315
    %1352 = vmatprep.subr.mxu0 0.0
    %1353 = vmatpush1.msra.mxu0 %v1316
    %1354 = vmatprep.subr.mxu0 0.0
    %1355 = vmatpush1.msra.mxu0 %v1317
    %1356 = vmatprep.subr.mxu0 0.0
    %1357 = vmatpush1.msra.mxu0 0.0
    %1358 = vmatprep.subr.mxu0 0.0
    %1359 = vmatpush1.msra.mxu0 0.0
    %1360 = vmatprep.subr.mxu0 0.0
    %1361 = vmatpush1.msra.mxu0 0.0
    %1362 = vmatprep.subr.mxu0 0.0
    %1363 = vmatpush1.msra.mxu0 0.0
    %1364 = vmatprep.subr.mxu0 0.0
    %1365 = vmatpush1.msra.mxu0 0.0
    %1366 = vmatprep.subr.mxu0 0.0
    %1367 = vmatpush1.msra.mxu0 0.0
    %1368 = vmatprep.subr.mxu0 0.0
    %1369 = vmatpush1.msra.mxu0 0.0
    %1370 = vmatprep.subr.mxu0 0.0
    %1371 = vmatpush1.msra.mxu0 0.0
    %1372 = vmatprep.subr.mxu0 0.0
    %1373 = vmatpush1.msra.mxu0 0.0
    %1374 = vmatprep.subr.mxu0 0.0
    %1375 = vmatpush1.msra.mxu0 0.0
    %1376 = vmatprep.subr.mxu0 0.0
    %1377 = vmatpush1.msra.mxu0 0.0
    %1378 = vmatprep.subr.mxu0 0.0
    %1379 = vmatpush1.msra.mxu0 0.0
    %1380 = vmatprep.subr.mxu0 0.0
    %1381 = vmatpush1.msra.mxu0 0.0
    %1382 = vmatprep.subr.mxu0 0.0
    %1383 = vmatpush1.msra.mxu0 0.0
    %1384 = vmatprep.subr.mxu0 0.0
    %1385 = vmatpush1.msra.mxu0 0.0
    %1386 = vmatprep.subr.mxu0 0.0
    %1387 = vmatpush1.msra.mxu0 0.0
    %1388 = vmatprep.subr.mxu0 0.0
    %1389 = vmatpush1.msra.mxu0 0.0
    %1390 = vmatprep.subr.mxu0 0.0
    %1391 = vmatpush1.msra.mxu0 0.0
    %1392 = vmatprep.subr.mxu0 0.0
    %1393 = vmatpush1.msra.mxu0 0.0
    %1394 = vmatprep.subr.mxu0 0.0
    %1395 = vmatpush1.msra.mxu0 0.0
    %1396 = vmatprep.subr.mxu0 0.0
    %1397 = vmatpush1.msra.mxu0 0.0
    %1398 = vmatprep.subr.mxu0 0.0
    %1399 = vmatpush1.msra.mxu0 0.0
    %1400 = vmatprep.subr.mxu0 0.0
    %1401 = vmatpush1.msra.mxu0 0.0
    %1402 = vmatprep.subr.mxu0 0.0
    %1403 = vmatpush1.msra.mxu0 0.0
    %1404 = vmatprep.subr.mxu0 0.0
    %1405 = vmatpush1.msra.mxu0 0.0
    %1406 = vmatprep.subr.mxu0 0.0
    %1407 = vmatpush1.msra.mxu0 0.0
    %1408 = vmatprep.subr.mxu0 0.0
    %1409 = vmatpush1.msra.mxu0 0.0
    %1410 = vmatprep.subr.mxu0 0.0
    %1411 = vmatpush1.msra.mxu0 0.0
    %1412 = vmatprep.mubr.f32.mxu0 0.0
    %1413 = vmatmul.mubr.f32.gmra.mrb[0].mxu0 %v1336
    %v1414 = vpop.f32.mrb[0].mxu0
    %v1415 = vadd.f32 %v1335, %v1414
    %v1416 = vpop.f32.mrb[0].mxu0
    %1417 = vmatprep.mubr.f32.mxu0 0.0
    %1418 = vmatmul.mubr.f32.gmra.mrb[0].mxu0 %v1338
    %v1419 = vpop.f32.mrb[0].mxu0
    %v1420 = vadd.f32 %v1335, %v1419
    %v1421 = vpop.f32.mrb[0].mxu0
    %1422 = vmatprep.mubr.f32.mxu0 0.0
    %1423 = vmatmul.mubr.f32.gmra.mrb[0].mxu0 %v1340
    %v1424 = vpop.f32.mrb[0].mxu0
    %v1425 = vadd.f32 %v1335, %v1424
    %v1426 = vpop.f32.mrb[0].mxu0
    %1427 = vmatprep.mubr.f32.mxu0 0.0
    %1428 = vmatmul.mubr.f32.gmra.mrb[0].mxu0 %v1342
    %v1429 = vpop.f32.mrb[0].mxu0
    %v1430 = vadd.f32 %v1335, %v1429
    %v1431 = vpop.f32.mrb[0].mxu0
    %1432 = vmatprep.mubr.f32.mxu0 0.0
    %1433 = vmatmul.mubr.f32.gmra.mrb[0].mxu0 %v1344
    %v1434 = vpop.f32.mrb[0].mxu0
    %v1435 = vadd.f32 %v1335, %v1434
    %v1436 = vpop.f32.mrb[0].mxu0
    %1437 = vmatprep.mubr.f32.mxu0 0.0
    %1438 = vmatmul.mubr.f32.gmra.mrb[0].mxu0 %v1346
    %v1439 = vpop.f32.mrb[0].mxu0
    %v1440 = vadd.f32 %v1335, %v1439
    %v1441 = vpop.f32.mrb[0].mxu0
    %1442 = vdwg.mxu0
    %1443 = vrot.lane.b32.xlu0 %v254, 96
    %v1444 = vpop.permute.xlu0 %1443
    %1445 = vrot.lane.b32.xlu0 %v259, 96
    %v1446 = vpop.permute.xlu0 %1445
    %1447 = vrot.lane.b32.xlu0 %v264, 96
    %v1448 = vpop.permute.xlu0 %1447
    %1449 = vrot.lane.b32.xlu0 %v269, 96
    %v1450 = vpop.permute.xlu0 %1449
    %1451 = vrot.lane.b32.xlu0 %v274, 96
    %v1452 = vpop.permute.xlu0 %1451
    %1453 = vrot.lane.b32.xlu0 %v279, 96
    %v1454 = vpop.permute.xlu0 %1453
    %v1461 = vadd.f32 %v1415, %v1444
    %v1462 = vadd.f32 %v1420, %v1446
    %v1463 = vadd.f32 %v1425, %v1448
    %v1464 = vadd.f32 %v1430, %v1450
    %v1465 = vadd.f32 %v1435, %v1452
    %v1466 = vadd.f32 %v1440, %v1454
    %v1467 = vmul.f32 %v1461, %v1461
    %v1468 = vmul.f32 %v1462, %v1462
    %v1469 = vmul.f32 %v1463, %v1463
    %v1470 = vmul.f32 %v1464, %v1464
    %v1471 = vmul.f32 %v1465, %v1465
    %v1472 = vmul.f32 %v1466, %v1466
    %1479 = vrot.lane.b32.xlu0 %v1467, 32
    %v1480 = vpop.permute.xlu0 %1479
    %1481 = vrot.lane.b32.xlu0 %v1468, 32
    %v1482 = vpop.permute.xlu0 %1481
    %1483 = vrot.lane.b32.xlu0 %v1469, 32
    %v1484 = vpop.permute.xlu0 %1483
    %1485 = vrot.lane.b32.xlu0 %v1470, 32
    %v1486 = vpop.permute.xlu0 %1485
    %1487 = vrot.lane.b32.xlu0 %v1471, 32
    %v1488 = vpop.permute.xlu0 %1487
    %1489 = vrot.lane.b32.xlu0 %v1472, 32
    %v1490 = vpop.permute.xlu0 %1489
    %v1497 = vsel %vm71, %v1461, %v1480
    %v1498 = vsel %vm71, %v1462, %v1482
    %v1499 = vsel %vm71, %v1463, %v1484
    %v1500 = vsel %vm71, %v1464, %v1486
    %v1501 = vsel %vm71, %v1465, %v1488
    %v1502 = vsel %vm71, %v1466, %v1490
    %v1503 = vsel %vm1039, %v1497, 0.0
    %v1504 = vsel %vm1039, %v1498, 0.0
    %v1505 = vadd.f32 %v1503, %v1504
    %v1506 = vsel %vm1039, %v1499, 0.0
    %v1507 = vadd.f32 %v1505, %v1506
    %v1508 = vsel %vm1039, %v1500, 0.0
    %v1509 = vadd.f32 %v1507, %v1508
    %v1510 = vsel %vm1039, %v1501, 0.0
    %v1511 = vadd.f32 %v1509, %v1510
    %v1512 = vsel %vm1039, %v1502, 0.0
    %v1513 = vadd.f32 %v1511, %v1512
    %v1514 = vrot.slane %v1513, 4
    %v1515 = vadd.f32 %v1513, %v1514
    %v1516 = vrot.slane %v1515, 2
    %v1517 = vadd.f32 %v1515, %v1516
    %v1518 = vrot.slane %v1517, 1
    %v1519 = vadd.f32 %v1517, %v1518
    %v1520 = vmul.f32 %v1519, 0.020833334
    %v1521 = vmul.f32 %v1520, %v1520
    %1523 = vrot.lane.b32.xlu0 %v1521, 32
    %v1524 = vpop.permute.xlu0 %1523
    %v1526 = vsub.f32 %v1520, %v1524
    %v1527 = vsub.f32 %v1461, %v1520
    %v1528 = vsub.f32 %v1462, %v1520
    %v1529 = vsub.f32 %v1463, %v1520
    %v1530 = vsub.f32 %v1464, %v1520
    %v1531 = vsub.f32 %v1465, %v1520
    %v1532 = vsub.f32 %v1466, %v1520
    %v1533 = vadd.f32 %v1526, 1e-05
    %v1534 = vrsqrt.pop %v1533
    %v1535 = vlaneseq
    %v1536 = vshrl.u32 %v1535, 7
    %v1537 = vsub.s32 0, %v1536
    %v1538 = vrot.slane %v1534, %v1537
    %1540 = vrot.lane.b32.xlu0 %v1538, 96
    %v1541 = vpop.permute.xlu0 %1540
    %v1543 = vmul.f32 %v1527, %v1541
    %v1544 = vmul.f32 %v1528, %v1541
    %v1545 = vmul.f32 %v1529, %v1541
    %v1546 = vmul.f32 %v1530, %v1541
    %v1547 = vmul.f32 %v1531, %v1541
    %v1548 = vmul.f32 %v1532, %v1541
    %v1549 = vlaneseq
    %v1550 = vshrl.u32 %v1549, 7
    %v1551 = vsub.s32 2, %v1550
    %v1552 = vrot.slane %v1331, %v1551
    %v1553 = vmul.f32 %v1543, %v1552
    %v1554 = vmul.f32 %v1544, %v1552
    %v1555 = vmul.f32 %v1545, %v1552
    %v1556 = vmul.f32 %v1546, %v1552
    %v1557 = vmul.f32 %v1547, %v1552
    %v1558 = vmul.f32 %v1548, %v1552
    %v1559 = vlaneseq
    %v1560 = vshrl.u32 %v1559, 7
    %v1561 = vsub.s32 3, %v1560
    %v1562 = vrot.slane %v1331, %v1561
    %v1563 = vadd.f32 %v1553, %v1562
    %v1564 = vadd.f32 %v1554, %v1562
    %v1565 = vadd.f32 %v1555, %v1562
    %v1566 = vadd.f32 %v1556, %v1562
    %v1567 = vadd.f32 %v1557, %v1562
    %v1568 = vadd.f32 %v1558, %v1562
    %v1570 = vlaneseq
    %v1571 = vshrl.u32 %v1570, 7
    %v1572 = vsub.s32 0, %v1571
    %v1573 = vrot.slane %v1322, %v1572
    %v1576 = vsel %vm71, %v1563, 0
    %v1579 = vsel %vm71, %v1564, 0
    %v1582 = vsel %vm71, %v1565, 0
    %v1585 = vsel %vm71, %v1566, 0
    %v1588 = vsel %vm71, %v1567, 0
    %v1591 = vsel %vm71, %v1568, 0
    %1593 = vmatprep.subr.mxu0 0.0
    %1594 = vmatpush1.msra.mxu0 %v1318
    %1595 = vmatprep.subr.mxu0 0.0
    %1596 = vmatpush1.msra.mxu0 %v1319
    %1597 = vmatprep.subr.mxu0 0.0
    %1598 = vmatpush1.msra.mxu0 %v1320
    %1599 = vmatprep.subr.mxu0 0.0
    %1600 = vmatpush1.msra.mxu0 %v1321
    %1601 = vmatprep.subr.mxu0 0.0
    %1602 = vmatpush1.msra.mxu0 0.0
    %1603 = vmatprep.subr.mxu0 0.0
    %1604 = vmatpush1.msra.mxu0 0.0
    %1605 = vmatprep.subr.mxu0 0.0
    %1606 = vmatpush1.msra.mxu0 0.0
    %1607 = vmatprep.subr.mxu0 0.0
    %1608 = vmatpush1.msra.mxu0 0.0
    %1609 = vmatprep.subr.mxu0 0.0
    %1610 = vmatpush1.msra.mxu0 0.0
    %1611 = vmatprep.subr.mxu0 0.0
    %1612 = vmatpush1.msra.mxu0 0.0
    %1613 = vmatprep.subr.mxu0 0.0
    %1614 = vmatpush1.msra.mxu0 0.0
    %1615 = vmatprep.subr.mxu0 0.0
    %1616 = vmatpush1.msra.mxu0 0.0
    %1617 = vmatprep.subr.mxu0 0.0
    %1618 = vmatpush1.msra.mxu0 0.0
    %1619 = vmatprep.subr.mxu0 0.0
    %1620 = vmatpush1.msra.mxu0 0.0
    %1621 = vmatprep.subr.mxu0 0.0
    %1622 = vmatpush1.msra.mxu0 0.0
    %1623 = vmatprep.subr.mxu0 0.0
    %1624 = vmatpush1.msra.mxu0 0.0
    %1625 = vmatprep.subr.mxu0 0.0
    %1626 = vmatpush1.msra.mxu0 0.0
    %1627 = vmatprep.subr.mxu0 0.0
    %1628 = vmatpush1.msra.mxu0 0.0
    %1629 = vmatprep.subr.mxu0 0.0
    %1630 = vmatpush1.msra.mxu0 0.0
    %1631 = vmatprep.subr.mxu0 0.0
    %1632 = vmatpush1.msra.mxu0 0.0
    %1633 = vmatprep.subr.mxu0 0.0
    %1634 = vmatpush1.msra.mxu0 0.0
    %1635 = vmatprep.subr.mxu0 0.0
    %1636 = vmatpush1.msra.mxu0 0.0
    %1637 = vmatprep.subr.mxu0 0.0
    %1638 = vmatpush1.msra.mxu0 0.0
    %1639 = vmatprep.subr.mxu0 0.0
    %1640 = vmatpush1.msra.mxu0 0.0
    %1641 = vmatprep.subr.mxu0 0.0
    %1642 = vmatpush1.msra.mxu0 0.0
    %1643 = vmatprep.subr.mxu0 0.0
    %1644 = vmatpush1.msra.mxu0 0.0
    %1645 = vmatprep.subr.mxu0 0.0
    %1646 = vmatpush1.msra.mxu0 0.0
    %1647 = vmatprep.subr.mxu0 0.0
    %1648 = vmatpush1.msra.mxu0 0.0
    %1649 = vmatprep.subr.mxu0 0.0
    %1650 = vmatpush1.msra.mxu0 0.0
    %1651 = vmatprep.subr.mxu0 0.0
    %1652 = vmatpush1.msra.mxu0 0.0
    %1653 = vmatprep.subr.mxu0 0.0
    %1654 = vmatpush1.msra.mxu0 0.0
    %1655 = vmatprep.subr.mxu0 0.0
    %1656 = vmatpush1.msra.mxu0 0.0
    %1657 = vmatprep.mubr.f32.mxu0 0.0
    %1658 = vmatmul.mubr.f32.gmra.mrb[0].mxu0 %v1576
    %v1659 = vpop.f32.mrb[0].mxu0
    %v1660 = vadd.f32 %v1573, %v1659
    %v1661 = vpop.f32.mrb[0].mxu0
    %1662 = vmatprep.mubr.f32.mxu0 0.0
    %1663 = vmatmul.mubr.f32.gmra.mrb[0].mxu0 %v1579
    %v1664 = vpop.f32.mrb[0].mxu0
    %v1665 = vadd.f32 %v1573, %v1664
    %v1666 = vpop.f32.mrb[0].mxu0
    %1667 = vmatprep.mubr.f32.mxu0 0.0
    %1668 = vmatmul.mubr.f32.gmra.mrb[0].mxu0 %v1582
    %v1669 = vpop.f32.mrb[0].mxu0
    %v1670 = vadd.f32 %v1573, %v1669
    %v1671 = vpop.f32.mrb[0].mxu0
    %1672 = vmatprep.mubr.f32.mxu0 0.0
    %1673 = vmatmul.mubr.f32.gmra.mrb[0].mxu0 %v1585
    %v1674 = vpop.f32.mrb[0].mxu0
    %v1675 = vadd.f32 %v1573, %v1674
    %v1676 = vpop.f32.mrb[0].mxu0
    %1677 = vmatprep.mubr.f32.mxu0 0.0
    %1678 = vmatmul.mubr.f32.gmra.mrb[0].mxu0 %v1588
    %v1679 = vpop.f32.mrb[0].mxu0
    %v1680 = vadd.f32 %v1573, %v1679
    %v1681 = vpop.f32.mrb[0].mxu0
    %1682 = vmatprep.mubr.f32.mxu0 0.0
    %1683 = vmatmul.mubr.f32.gmra.mrb[0].mxu0 %v1591
    %v1684 = vpop.f32.mrb[0].mxu0
    %v1685 = vadd.f32 %v1573, %v1684
    %v1686 = vpop.f32.mrb[0].mxu0
    %1687 = vdwg.mxu0
    %v1688 = vmax.f32 %v1660, 0.0
    %v1689 = vmax.f32 %v1665, 0.0
    %v1690 = vmax.f32 %v1670, 0.0
    %v1691 = vmax.f32 %v1675, 0.0
    %v1692 = vmax.f32 %v1680, 0.0
    %v1693 = vmax.f32 %v1685, 0.0
    %v1694 = vlaneseq
    %v1695 = vshrl.u32 %v1694, 7
    %v1696 = vsub.s32 1, %v1695
    %v1697 = vrot.slane %v1331, %v1696
    %v1699 = vsel %vm1039, %v1688, 0
    %v1702 = vsel %vm1039, %v1689, 0
    %v1705 = vsel %vm1039, %v1690, 0
    %v1708 = vsel %vm1039, %v1691, 0
    %v1711 = vsel %vm1039, %v1692, 0
    %v1714 = vsel %vm1039, %v1693, 0
    %1716 = vmatprep.subr.mxu0 0.0
    %1717 = vmatpush1.msra.mxu0 %v1323
    %1718 = vmatprep.subr.mxu0 0.0
    %1719 = vmatpush1.msra.mxu0 %v1324
    %1720 = vmatprep.subr.mxu0 0.0
    %1721 = vmatpush1.msra.mxu0 %v1325
    %1722 = vmatprep.subr.mxu0 0.0
    %1723 = vmatpush1.msra.mxu0 %v1326
    %1724 = vmatprep.subr.mxu0 0.0
    %1725 = vmatpush1.msra.mxu0 %v1327
    %1726 = vmatprep.subr.mxu0 0.0
    %1727 = vmatpush1.msra.mxu0 %v1328
    %1728 = vmatprep.subr.mxu0 0.0
    %1729 = vmatpush1.msra.mxu0 %v1329
    %1730 = vmatprep.subr.mxu0 0.0
    %1731 = vmatpush1.msra.mxu0 %v1330
    %1732 = vmatprep.subr.mxu0 0.0
    %1733 = vmatpush1.msra.mxu0 0.0
    %1734 = vmatprep.subr.mxu0 0.0
    %1735 = vmatpush1.msra.mxu0 0.0
    %1736 = vmatprep.subr.mxu0 0.0
    %1737 = vmatpush1.msra.mxu0 0.0
    %1738 = vmatprep.subr.mxu0 0.0
    %1739 = vmatpush1.msra.mxu0 0.0
    %1740 = vmatprep.subr.mxu0 0.0
    %1741 = vmatpush1.msra.mxu0 0.0
    %1742 = vmatprep.subr.mxu0 0.0
    %1743 = vmatpush1.msra.mxu0 0.0
    %1744 = vmatprep.subr.mxu0 0.0
    %1745 = vmatpush1.msra.mxu0 0.0
    %1746 = vmatprep.subr.mxu0 0.0
    %1747 = vmatpush1.msra.mxu0 0.0
    %1748 = vmatprep.subr.mxu0 0.0
    %1749 = vmatpush1.msra.mxu0 0.0
    %1750 = vmatprep.subr.mxu0 0.0
    %1751 = vmatpush1.msra.mxu0 0.0
    %1752 = vmatprep.subr.mxu0 0.0
    %1753 = vmatpush1.msra.mxu0 0.0
    %1754 = vmatprep.subr.mxu0 0.0
    %1755 = vmatpush1.msra.mxu0 0.0
    %1756 = vmatprep.subr.mxu0 0.0
    %1757 = vmatpush1.msra.mxu0 0.0
    %1758 = vmatprep.subr.mxu0 0.0
    %1759 = vmatpush1.msra.mxu0 0.0
    %1760 = vmatprep.subr.mxu0 0.0
    %1761 = vmatpush1.msra.mxu0 0.0
    %1762 = vmatprep.subr.mxu0 0.0
    %1763 = vmatpush1.msra.mxu0 0.0
    %1764 = vmatprep.subr.mxu0 0.0
    %1765 = vmatpush1.msra.mxu0 0.0
    %1766 = vmatprep.subr.mxu0 0.0
    %1767 = vmatpush1.msra.mxu0 0.0
    %1768 = vmatprep.subr.mxu0 0.0
    %1769 = vmatpush1.msra.mxu0 0.0
    %1770 = vmatprep.subr.mxu0 0.0
    %1771 = vmatpush1.msra.mxu0 0.0
    %1772 = vmatprep.subr.mxu0 0.0
    %1773 = vmatpush1.msra.mxu0 0.0
    %1774 = vmatprep.subr.mxu0 0.0
    %1775 = vmatpush1.msra.mxu0 0.0
    %1776 = vmatprep.subr.mxu0 0.0
    %1777 = vmatpush1.msra.mxu0 0.0
    %1778 = vmatprep.subr.mxu0 0.0
    %1779 = vmatpush1.msra.mxu0 0.0
    %1780 = vmatprep.mubr.f32.mxu0 0.0
    %1781 = vmatmul.mubr.f32.gmra.mrb[0].mxu0 %v1699
    %v1782 = vpop.f32.mrb[0].mxu0
    %v1783 = vadd.f32 %v1697, %v1782
    %v1784 = vpop.f32.mrb[0].mxu0
    %1785 = vmatprep.mubr.f32.mxu0 0.0
    %1786 = vmatmul.mubr.f32.gmra.mrb[0].mxu0 %v1702
    %v1787 = vpop.f32.mrb[0].mxu0
    %v1788 = vadd.f32 %v1697, %v1787
    %v1789 = vpop.f32.mrb[0].mxu0
    %1790 = vmatprep.mubr.f32.mxu0 0.0
    %1791 = vmatmul.mubr.f32.gmra.mrb[0].mxu0 %v1705
    %v1792 = vpop.f32.mrb[0].mxu0
    %v1793 = vadd.f32 %v1697, %v1792
    %v1794 = vpop.f32.mrb[0].mxu0
    %1795 = vmatprep.mubr.f32.mxu0 0.0
    %1796 = vmatmul.mubr.f32.gmra.mrb[0].mxu0 %v1708
    %v1797 = vpop.f32.mrb[0].mxu0
    %v1798 = vadd.f32 %v1697, %v1797
    %v1799 = vpop.f32.mrb[0].mxu0
    %1800 = vmatprep.mubr.f32.mxu0 0.0
    %1801 = vmatmul.mubr.f32.gmra.mrb[0].mxu0 %v1711
    %v1802 = vpop.f32.mrb[0].mxu0
    %v1803 = vadd.f32 %v1697, %v1802
    %v1804 = vpop.f32.mrb[0].mxu0
    %1805 = vmatprep.mubr.f32.mxu0 0.0
    %1806 = vmatmul.mubr.f32.gmra.mrb[0].mxu0 %v1714
    %v1807 = vpop.f32.mrb[0].mxu0
    %v1808 = vadd.f32 %v1697, %v1807
    %v1809 = vpop.f32.mrb[0].mxu0
    %1810 = vdwg.mxu0
    %v1811 = vadd.f32 %v1783, %v1563
    %v1812 = vadd.f32 %v1788, %v1564
    %v1813 = vadd.f32 %v1793, %v1565
    %v1814 = vadd.f32 %v1798, %v1566
    %v1815 = vadd.f32 %v1803, %v1567
    %v1816 = vadd.f32 %v1808, %v1568
    %v1817 = vmul.f32 %v1811, %v1811
    %v1818 = vmul.f32 %v1812, %v1812
    %v1819 = vmul.f32 %v1813, %v1813
    %v1820 = vmul.f32 %v1814, %v1814
    %v1821 = vmul.f32 %v1815, %v1815
    %v1822 = vmul.f32 %v1816, %v1816
    %1829 = vrot.lane.b32.xlu0 %v1817, 32
    %v1830 = vpop.permute.xlu0 %1829
    %1831 = vrot.lane.b32.xlu0 %v1818, 32
    %v1832 = vpop.permute.xlu0 %1831
    %1833 = vrot.lane.b32.xlu0 %v1819, 32
    %v1834 = vpop.permute.xlu0 %1833
    %1835 = vrot.lane.b32.xlu0 %v1820, 32
    %v1836 = vpop.permute.xlu0 %1835
    %1837 = vrot.lane.b32.xlu0 %v1821, 32
    %v1838 = vpop.permute.xlu0 %1837
    %1839 = vrot.lane.b32.xlu0 %v1822, 32
    %v1840 = vpop.permute.xlu0 %1839
    %v1847 = vsel %vm71, %v1811, %v1830
    %v1848 = vsel %vm71, %v1812, %v1832
    %v1849 = vsel %vm71, %v1813, %v1834
    %v1850 = vsel %vm71, %v1814, %v1836
    %v1851 = vsel %vm71, %v1815, %v1838
    %v1852 = vsel %vm71, %v1816, %v1840
    %v1853 = vsel %vm1039, %v1847, 0.0
    %v1854 = vsel %vm1039, %v1848, 0.0
    %v1855 = vadd.f32 %v1853, %v1854
    %v1856 = vsel %vm1039, %v1849, 0.0
    %v1857 = vadd.f32 %v1855, %v1856
    %v1858 = vsel %vm1039, %v1850, 0.0
    %v1859 = vadd.f32 %v1857, %v1858
    %v1860 = vsel %vm1039, %v1851, 0.0
    %v1861 = vadd.f32 %v1859, %v1860
    %v1862 = vsel %vm1039, %v1852, 0.0
    %v1863 = vadd.f32 %v1861, %v1862
    %v1864 = vrot.slane %v1863, 4
    %v1865 = vadd.f32 %v1863, %v1864
    %v1866 = vrot.slane %v1865, 2
    %v1867 = vadd.f32 %v1865, %v1866
    %v1868 = vrot.slane %v1867, 1
    %v1869 = vadd.f32 %v1867, %v1868
    %v1870 = vmul.f32 %v1869, 0.020833334
    %v1871 = vmul.f32 %v1870, %v1870
    %1873 = vrot.lane.b32.xlu0 %v1871, 32
    %v1874 = vpop.permute.xlu0 %1873
    %v1876 = vsub.f32 %v1870, %v1874
    %v1877 = vsub.f32 %v1811, %v1870
    %v1878 = vsub.f32 %v1812, %v1870
    %v1879 = vsub.f32 %v1813, %v1870
    %v1880 = vsub.f32 %v1814, %v1870
    %v1881 = vsub.f32 %v1815, %v1870
    %v1882 = vsub.f32 %v1816, %v1870
    %v1883 = vadd.f32 %v1876, 1e-05
    %v1884 = vrsqrt.pop %v1883
    %v1885 = vlaneseq
    %v1886 = vshrl.u32 %v1885, 7
    %v1887 = vsub.s32 0, %v1886
    %v1888 = vrot.slane %v1884, %v1887
    %1890 = vrot.lane.b32.xlu0 %v1888, 96
    %v1891 = vpop.permute.xlu0 %1890
    %v1893 = vmul.f32 %v1877, %v1891
    %v1894 = vmul.f32 %v1878, %v1891
    %v1895 = vmul.f32 %v1879, %v1891
    %v1896 = vmul.f32 %v1880, %v1891
    %v1897 = vmul.f32 %v1881, %v1891
    %v1898 = vmul.f32 %v1882, %v1891
    %v1899 = vlaneseq
    %v1900 = vshrl.u32 %v1899, 7
    %v1901 = vsub.s32 4, %v1900
    %v1902 = vrot.slane %v1331, %v1901
    %v1903 = vmul.f32 %v1893, %v1902
    %v1904 = vmul.f32 %v1894, %v1902
    %v1905 = vmul.f32 %v1895, %v1902
    %v1906 = vmul.f32 %v1896, %v1902
    %v1907 = vmul.f32 %v1897, %v1902
    %v1908 = vmul.f32 %v1898, %v1902
    %v1909 = vlaneseq
    %v1910 = vshrl.u32 %v1909, 7
    %v1911 = vsub.s32 5, %v1910
    %v1912 = vrot.slane %v1331, %v1911
    %v1913 = vadd.f32 %v1903, %v1912
    %v1914 = vadd.f32 %v1904, %v1912
    %v1915 = vadd.f32 %v1905, %v1912
    %v1916 = vadd.f32 %v1906, %v1912
    %v1917 = vadd.f32 %v1907, %v1912
    %v1918 = vadd.f32 %v1908, %v1912
    %1919 = vst.msk [vmem:[%s20] sm:$0xff] %vm71, %v1913
    %1920 = vst.msk [vmem:[%s20 + $0x8] sm:$0xff] %vm71, %v1914
    %1921 = vst.msk [vmem:[%s20 + $0x10] sm:$0xff] %vm71, %v1915
    %1922 = vst.msk [vmem:[%s20 + $0x18] sm:$0xff] %vm71, %v1916
    %1923 = vst.msk [vmem:[%s20 + $0x20] sm:$0xff] %vm71, %v1917
    %1924 = vst.msk [vmem:[%s20 + $0x28] sm:$0xff] %vm71, %v1918
    // Predicated region
    $region78: #{graph_transformer_layer.1} parent=1 // pred_check
      _
    $region79: #{graph_transformer_layer.1} parent=1 // pred_check_branch
      %1926 = sbr.rel (0) target = $region81
    $region80: #{graph_transformer_layer.1} parent=1 // pred_region
      %s1928 = ssub.s32 256, 256
      %1929 = vsyncadd [#allocation3], %s1928
      %s1930 = sshll.u32 [#allocation2], 4
      %s1931 = int_to_ptr.vmem [resolvable:$true] %s1930
      %1936 = dma.vmem_to_hbm [thread:$0]  %s1931, 256, %s19, [#allocation3], 128, 128, 8
    $region81: #{graph_transformer_layer.1} parent=1 // pred_fallthru
      _
    // Predicated region
    $region82: #{graph_transformer_layer.1} parent=1 // pred_check
      _
    $region83: #{graph_transformer_layer.1} parent=1 // pred_check_branch
      %1938 = sbr.rel (0) target = $region85
    $region84: #{graph_transformer_layer.1} parent=1 // pred_region
      _
    $region85: #{graph_transformer_layer.1} parent=1 // pred_fallthru
      _
    // Predicated region
    $region86: #{graph_transformer_layer.1} parent=1 // pred_check
      _
    $region87: #{graph_transformer_layer.1} parent=1 // pred_check_branch
      %1940 = sbr.rel (0) target = $region89
    $region88: #{graph_transformer_layer.1} parent=1 // pred_region
      %1941 = dma.done [#allocation3], 256
    $region89: #{graph_transformer_layer.1} parent=1 // pred_fallthru
      _
    // Predicated region
    $region90: #{graph_transformer_layer.1} parent=1 // pred_check
      _
    $region91: #{graph_transformer_layer.1} parent=1 // pred_check_branch
      %1943 = sbr.rel (0) target = $region93
    $region92: #{graph_transformer_layer.1} parent=1 // pred_region
      _
    $region93: #{graph_transformer_layer.1} parent=1 // pred_fallthru
      _
    %1944 = vsyncpa [#allocation3], 1

</llo_original>
